<compile_context>
chip_gen: v7x
topology: tpu7x:2x2x1
jax: 0.10.0
libtpu: 0.0.40
codegen_flags: <defaults>
</compile_context>

<pallas_src>
import functools

import jax
import jax.numpy as jnp
from jax import lax
from jax.experimental import pallas as pl
from jax.experimental.pallas import tpu as pltpu


def _attention_kernel(hidden_ref, ctx_ref, mask_ref, pad_bias_ref,
                      wh_t_ref, wc_t_ref, b_ref, v_ref,
                      out_ref, score_ref, *, s_chunk, n_chunks):
    # hidden_ref:   (Bb, dec)          f32
    # ctx_ref:      (Bb, Sp, enc)      f32   (Sp = src_len padded to mult of 128)
    # mask_ref:     (Bb, Sp)           f32   (0 => masked)
    # pad_bias_ref: (1, Sp)            f32   (0 on real columns, -inf on padding)
    # wh_t_ref:     (dec, d_pad)       f32   (decoder half of attn.weight, pre-T, N-padded)
    # wc_t_ref:     (enc, d_pad)       f32   (encoder half of attn.weight, pre-T, N-padded)
    # b_ref:        (1, d_pad)         f32   (attn.bias, N-padded with zeros)
    # v_ref:        (1, d_pad)         f32   (v.weight, N-padded with zeros)
    # out_ref:      (Bb, Sp)           f32
    # score_ref:    (Bb, Sp)           f32 VMEM scratch
    hidden = hidden_ref[...]
    wh_t = wh_t_ref[...]
    wc_t = wc_t_ref[...]
    b = b_ref[...]
    v = v_ref[...]

    bb = hidden.shape[0]
    enc = wc_t.shape[0]
    d_pad = wh_t.shape[1]

    # hidden @ Wh^T + b -> (Bb, d_pad).  Bias folded here: B*D adds, not B*S*D.
    h_proj = jnp.dot(hidden, wh_t, preferred_element_type=jnp.float32) + b
    h_proj_b = h_proj[:, None, :]                       # hoisted expand_dims

    def chunk_body(step, carry):
        start = pl.multiple_of(step * s_chunk, s_chunk)
        ctx_c = ctx_ref[:, pl.ds(start, s_chunk), :]    # (Bb, Sc, enc)
        # Collapse (Bb, Sc) rows: no-op relayout (Sc is a multiple of 128 and
        # the minor dim is unchanged) -> single large-M MXU matmul.
        c_proj = jnp.dot(ctx_c.reshape(bb * s_chunk, enc), wc_t,
                         preferred_element_type=jnp.float32)
        c_proj = c_proj.reshape(bb, s_chunk, d_pad)
        energy = jnp.tanh(h_proj_b + c_proj)            # (Bb, Sc, d_pad)  EUP
        # v-projection as a lane reduce (padded v lanes are 0 -> exact).
        score_ref[:, pl.ds(start, s_chunk)] = jnp.sum(energy * v, axis=-1)
        return carry

    lax.fori_loop(0, n_chunks, chunk_body, 0, unroll=True)

    # Epilogue: mask fill, kill padding columns, exact softmax over src_len.
    score = score_ref[...]                              # (Bb, Sp)
    mask = mask_ref[...]
    score = jnp.where(mask == 0, jnp.float32(-1.0e10), score)
    score = score + pad_bias_ref[...]                   # -inf on padded columns

    m = jnp.max(score, axis=1, keepdims=True)           # never -inf (>=1 real col)
    ex = jnp.exp(score - m)
    out_ref[...] = ex / jnp.sum(ex, axis=1, keepdims=True)


def _pick_b_block(B, S_pad, enc, dec, d_pad, s_chunk,
                  tile_budget_bytes=36 * 1024 * 1024, b_cap=64):
    """Largest batch tile (multiple of 8) whose steady-state VMEM fits budget."""
    per_row = 4 * (2 * S_pad * enc        # ctx tile, double-buffered
                   + 2 * S_pad            # mask tile, double-buffered
                   + 2 * S_pad            # out tile, double-buffered
                   + S_pad                # score scratch
                   + 3 * s_chunk * d_pad  # chunk temporaries (c_proj/energy/prod)
                   + 2 * dec)             # hidden tile
    fixed = 4 * 2 * (dec * d_pad + enc * d_pad + 2 * d_pad + S_pad)  # resident weights/bias
    avail = max(tile_budget_bytes - fixed, per_row * 8)
    bb = max(8, min(b_cap, (avail // per_row) // 8 * 8))
    b_req = ((B + 7) // 8) * 8
    bb = min(bb, b_req)
    # v7x megacore: keep >= 2 grid steps whenever the (padded) batch allows it.
    if b_req > 8 and -(-b_req // bb) < 2:
        bb = max(8, (b_req // 2) // 8 * 8)
    return bb


def attention_pallas(hidden, context_encodings, context_masks,
                     attn_weight, attn_bias, v_weight,
                     *, b_block=None, vmem_limit_bytes=48 * 1024 * 1024):
    """hidden: (B, dec); context_encodings: (B, S, enc); context_masks: (B, S)
    attn_weight: (dec, dec+enc) [nn.Linear layout]; attn_bias: (dec,);
    v_weight: (1, dec)."""
    hidden = hidden.astype(jnp.float32)
    context_encodings = context_encodings.astype(jnp.float32)
    context_masks = context_masks.astype(jnp.float32)

    B, S, enc = context_encodings.shape
    dec = hidden.shape[1]

    # --- host-side layout prep -------------------------------------------
    # torch.cat((hidden, ctx), dim=2): hidden features come first in the weight.
    # Pre-transpose and zero-pad the output (N) dim to a multiple of 128 for a
    # lane-dense MXU result path; padded bias/v lanes are 0 -> exact result.
    d_pad = pl.cdiv(dec, 128) * 128
    S_pad = pl.cdiv(S, 128) * 128

    aw = jnp.asarray(attn_weight, jnp.float32)
    wh_t = jnp.zeros((dec, d_pad), jnp.float32).at[:, :dec].set(aw[:, :dec].T)
    wc_t = jnp.zeros((enc, d_pad), jnp.float32).at[:, :dec].set(aw[:, dec:].T)
    b2 = jnp.zeros((1, d_pad), jnp.float32).at[0, :dec].set(
        jnp.asarray(attn_bias, jnp.float32))
    v2 = jnp.zeros((1, d_pad), jnp.float32).at[0, :dec].set(
        jnp.asarray(v_weight, jnp.float32).reshape(dec))

    # Additive column bias: 0 on real columns, -inf on lane padding.
    pad_bias = jnp.where(jnp.arange(S_pad) < S, 0.0,
                         -jnp.inf).astype(jnp.float32).reshape(1, S_pad)

    # In-kernel src_len chunk: largest of {512, 384, 256, 128} dividing S_pad.
    s_chunk = 128
    for cand in (512, 384, 256, 128):
        if S_pad % cand == 0:
            s_chunk = cand
            break
    n_chunks = S_pad // s_chunk

    if b_block is None:
        b_block = _pick_b_block(B, S_pad, enc, dec, d_pad, s_chunk)
    B_pad = pl.cdiv(B, b_block) * b_block

    hidden_p = jnp.pad(hidden, ((0, B_pad - B), (0, 0)))
    ctx_p = jnp.pad(context_encodings,
                    ((0, B_pad - B), (0, S_pad - S), (0, 0)))
    mask_p = jnp.pad(context_masks, ((0, B_pad - B), (0, S_pad - S)))

    grid = (B_pad // b_block,)

    cost = pl.CostEstimate(
        flops=int(2 * B_pad * S_pad * enc * d_pad      # ctx projection (dominant)
                  + 2 * B_pad * dec * d_pad            # hidden projection
                  + 2 * B_pad * S_pad * d_pad),        # v reduction
        transcendentals=int(B_pad * S_pad * d_pad + B_pad * S_pad),
        bytes_accessed=int(4 * (B_pad * S_pad * enc    # ctx stream (dominant)
                                + 2 * B_pad * S_pad    # mask + out
                                + B_pad * dec
                                + (dec + enc + 2) * d_pad + S_pad)),
    )

    out_p = pl.pallas_call(
        functools.partial(_attention_kernel, s_chunk=s_chunk, n_chunks=n_chunks),
        out_shape=jax.ShapeDtypeStruct((B_pad, S_pad), jnp.float32),
        grid=grid,
        in_specs=[
            pl.BlockSpec((b_block, dec), lambda i: (i, 0)),            # hidden
            pl.BlockSpec((b_block, S_pad, enc), lambda i: (i, 0, 0)),  # ctx
            pl.BlockSpec((b_block, S_pad), lambda i: (i, 0)),          # mask
            pl.BlockSpec((1, S_pad), lambda i: (0, 0)),                # pad bias (resident)
            pl.BlockSpec((dec, d_pad), lambda i: (0, 0)),              # wh_t (resident)
            pl.BlockSpec((enc, d_pad), lambda i: (0, 0)),              # wc_t (resident)
            pl.BlockSpec((1, d_pad), lambda i: (0, 0)),                # bias (resident)
            pl.BlockSpec((1, d_pad), lambda i: (0, 0)),                # v    (resident)
        ],
        out_specs=pl.BlockSpec((b_block, S_pad), lambda i: (i, 0)),
        scratch_shapes=[pltpu.VMEM((b_block, S_pad), jnp.float32)],    # scores
        compiler_params=pltpu.CompilerParams(
            dimension_semantics=("parallel",),
            vmem_limit_bytes=vmem_limit_bytes),
        cost_estimate=cost,
    )(hidden_p, ctx_p, mask_p, pad_bias, wh_t, wc_t, b2, v2)

    return out_p[:B, :S]


def attention_reference(hidden, context_encodings, context_masks,
                        attn_weight, attn_bias, v_weight):
    """Pure-JAX reference mirroring the PyTorch forward exactly."""
    B, S, _ = context_encodings.shape
    h_rep = jnp.repeat(hidden[:, None, :], S, axis=1)            # (B, S, dec)
    cat = jnp.concatenate([h_rep, context_encodings], axis=2)    # (B, S, dec+enc)
    energy = jnp.tanh(cat @ attn_weight.T + attn_bias)           # (B, S, dec)
    attention = (energy @ v_weight.T)[..., 0]                    # (B, S)
    attention = jnp.where(context_masks == 0, -1.0e10, attention)
    return jax.nn.softmax(attention, axis=1)


if __name__ == "__main__":
    B, S = 2, 8
    enc_hidden, dec_hidden = 32, 32

    key = jax.random.PRNGKey(0)
    k_h, k_c, k_w, k_b, k_v = jax.random.split(key, 5)

    hidden = jax.random.normal(k_h, (B, dec_hidden), dtype=jnp.float32)
    context = jax.random.normal(k_c, (B, S, enc_hidden), dtype=jnp.float32)

    # mask: batch 1 has its last two positions masked out
    mask = jnp.ones((B, S), dtype=jnp.float32)
    mask = mask.at[1, 6:].set(0.0)

    # Deterministic init matching nn.Linear default shapes
    #   attn: Linear(enc+dec -> dec), v: Linear(dec -> 1, bias=False)
    fan_in_attn = enc_hidden + dec_hidden
    bound_attn = 1.0 / jnp.sqrt(jnp.float32(fan_in_attn))
    attn_weight = jax.random.uniform(
        k_w, (dec_hidden, fan_in_attn), jnp.float32, -bound_attn, bound_attn)
    attn_bias = jax.random.uniform(
        k_b, (dec_hidden,), jnp.float32, -bound_attn, bound_attn)
    bound_v = 1.0 / jnp.sqrt(jnp.float32(dec_hidden))
    v_weight = jax.random.uniform(
        k_v, (1, dec_hidden), jnp.float32, -bound_v, bound_v)

    out = attention_pallas(hidden, context, mask,
                           attn_weight, attn_bias, v_weight)
    out = jax.block_until_ready(out)

    ref = attention_reference(hidden, context, mask,
                              attn_weight, attn_bias, v_weight)
    assert out.shape == (B, S)
    assert jnp.allclose(out, ref, atol=1e-5, rtol=1e-5), (out, ref)
    # rows sum to 1
    assert jnp.allclose(jnp.sum(out, axis=1), 1.0, atol=1e-5)
    # masked positions get (near-)zero weight
    assert float(jnp.max(out[1, 6:])) < 1e-6

    print("KERNEL_OK")
</pallas_src>

<mosaic_0001>
module attributes {stable_mosaic.version = 11 : i64} {
  func.func @_attention_kernel(%arg0: i32, %arg1: memref<8x32xf32, #tpu.memory_space<vmem>>, %arg2: memref<8x128x32xf32, #tpu.memory_space<vmem>>, %arg3: memref<8x128xf32, #tpu.memory_space<vmem>>, %arg4: memref<1x128xf32, #tpu.memory_space<vmem>>, %arg5: memref<32x128xf32, #tpu.memory_space<vmem>>, %arg6: memref<32x128xf32, #tpu.memory_space<vmem>>, %arg7: memref<1x128xf32, #tpu.memory_space<vmem>>, %arg8: memref<1x128xf32, #tpu.memory_space<vmem>>, %arg9: memref<8x128xf32, #tpu.memory_space<vmem>>, %arg10: memref<8x128xf32, #tpu.memory_space<vmem>>) attributes {dimension_semantics = [#tpu.dimension_semantics<parallel>], iteration_bounds = array<i64: 1>, scalar_prefetch = 0 : i64, scratch_operands = 1 : i64, tpu.core_type = #tpu.core_type<tc>, window_params = [{transform_indices = @transform_0, window_bounds = array<i64: 8, 32>}, {transform_indices = @transform_1, window_bounds = array<i64: 8, 128, 32>}, {transform_indices = @transform_2, window_bounds = array<i64: 8, 128>}, {pipeline_mode = #tpu.pipeline_mode<synchronous>, transform_indices = @transform_3, window_bounds = array<i64: 1, 128>}, {pipeline_mode = #tpu.pipeline_mode<synchronous>, transform_indices = @transform_4, window_bounds = array<i64: 32, 128>}, {pipeline_mode = #tpu.pipeline_mode<synchronous>, transform_indices = @transform_5, window_bounds = array<i64: 32, 128>}, {pipeline_mode = #tpu.pipeline_mode<synchronous>, transform_indices = @transform_6, window_bounds = array<i64: 1, 128>}, {pipeline_mode = #tpu.pipeline_mode<synchronous>, transform_indices = @transform_7, window_bounds = array<i64: 1, 128>}, {transform_indices = @transform_8, window_bounds = array<i64: 8, 128>}]} {
    %c0 = arith.constant 0 : index
    %c0_0 = arith.constant 0 : index
    %0 = vector.load %arg1[%c0, %c0_0] : memref<8x32xf32, #tpu.memory_space<vmem>>, vector<8x32xf32>
    %c0_1 = arith.constant 0 : index
    %c0_2 = arith.constant 0 : index
    %1 = vector.load %arg5[%c0_1, %c0_2] : memref<32x128xf32, #tpu.memory_space<vmem>>, vector<32x128xf32>
    %c0_3 = arith.constant 0 : index
    %c0_4 = arith.constant 0 : index
    %2 = vector.load %arg6[%c0_3, %c0_4] : memref<32x128xf32, #tpu.memory_space<vmem>>, vector<32x128xf32>
    %c0_5 = arith.constant 0 : index
    %c0_6 = arith.constant 0 : index
    %3 = vector.load %arg7[%c0_5, %c0_6] : memref<1x128xf32, #tpu.memory_space<vmem>>, vector<1x128xf32>
    %c0_7 = arith.constant 0 : index
    %c0_8 = arith.constant 0 : index
    %4 = vector.load %arg8[%c0_7, %c0_8] : memref<1x128xf32, #tpu.memory_space<vmem>>, vector<1x128xf32>
    %cst = arith.constant dense<0.000000e+00> : vector<8x128xf32>
    %5 = tpu.matmul %0, %1, %cst {dimension_numbers = #tpu.dot_dimension_numbers<[1], [0], [0], [1], [0, 0, 1, 1], [], []>} : vector<8x32xf32>, vector<32x128xf32>, vector<8x128xf32> -> vector<8x128xf32>
    %6 = vector.broadcast %3 : vector<1x128xf32> to vector<8x128xf32>
    %7 = arith.addf %5, %6 : vector<8x128xf32>
    %8 = vector.shape_cast %7 : vector<8x128xf32> to vector<8x1x128xf32>
    %c0_i32 = arith.constant 0 : i32
    %c128_i32 = arith.constant 128 : i32
    %9 = arith.muli %c0_i32, %c128_i32 : i32
    %10 = tpu.assume_multiple %9, 128 : i32
    %c0_9 = arith.constant 0 : index
    %11 = arith.index_cast %10 : i32 to index
    %c0_10 = arith.constant 0 : index
    %12 = vector.load %arg2[%c0_9, %11, %c0_10] : memref<8x128x32xf32, #tpu.memory_space<vmem>>, vector<8x128x32xf32>
    %13 = vector.shape_cast %12 : vector<8x128x32xf32> to vector<1024x32xf32>
    %cst_11 = arith.constant dense<0.000000e+00> : vector<1024x128xf32>
    %14 = tpu.matmul %13, %2, %cst_11 {dimension_numbers = #tpu.dot_dimension_numbers<[1], [0], [0], [1], [0, 0, 1, 1], [], []>} : vector<1024x32xf32>, vector<32x128xf32>, vector<1024x128xf32> -> vector<1024x128xf32>
    %15 = vector.shape_cast %14 : vector<1024x128xf32> to vector<8x128x128xf32>
    %16 = vector.broadcast %8 : vector<8x1x128xf32> to vector<8x128x128xf32>
    %17 = arith.addf %16, %15 : vector<8x128x128xf32>
    %18 = math.tanh %17 : vector<8x128x128xf32>
    %19 = vector.shape_cast %4 : vector<1x128xf32> to vector<1x1x128xf32>
    %20 = vector.broadcast %19 : vector<1x1x128xf32> to vector<8x128x128xf32>
    %21 = arith.mulf %18, %20 : vector<8x128x128xf32>
    %cst_12 = arith.constant dense<0.000000e+00> : vector<8x128xf32>
    %22 = vector.multi_reduction <add>, %21, %cst_12 [2] : vector<8x128x128xf32> to vector<8x128xf32>
    %c0_13 = arith.constant 0 : index
    %23 = arith.index_cast %10 : i32 to index
    %24 = vector.load %arg10[%c0_13, %23] : memref<8x128xf32, #tpu.memory_space<vmem>>, vector<8x128xf32>
    tpu.vector_store %arg10[%c0_13, %23], %22 {strides = array<i32>} : memref<8x128xf32, #tpu.memory_space<vmem>>, vector<8x128xf32>,
    %c1_i32 = arith.constant 1 : i32
    %c0_14 = arith.constant 0 : index
    %c0_15 = arith.constant 0 : index
    %25 = vector.load %arg10[%c0_14, %c0_15] : memref<8x128xf32, #tpu.memory_space<vmem>>, vector<8x128xf32>
    %c0_16 = arith.constant 0 : index
    %c0_17 = arith.constant 0 : index
    %26 = vector.load %arg3[%c0_16, %c0_17] : memref<8x128xf32, #tpu.memory_space<vmem>>, vector<8x128xf32>
    %cst_18 = arith.constant 0.000000e+00 : f32
    %27 = vector.broadcast %cst_18 : f32 to vector<8x128xf32>
    %28 = arith.cmpf oeq, %26, %27 : vector<8x128xf32>
    %cst_19 = arith.constant -1.000000e+10 : f32
    %29 = vector.broadcast %cst_19 : f32 to vector<8x128xf32>
    %30 = arith.select %28, %29, %25 : vector<8x128xi1>, vector<8x128xf32>
    %c0_20 = arith.constant 0 : index
    %c0_21 = arith.constant 0 : index
    %31 = vector.load %arg4[%c0_20, %c0_21] : memref<1x128xf32, #tpu.memory_space<vmem>>, vector<1x128xf32>
    %32 = vector.broadcast %31 : vector<1x128xf32> to vector<8x128xf32>
    %33 = arith.addf %30, %32 : vector<8x128xf32>
    %cst_22 = arith.constant dense<0xFF800000> : vector<8xf32>
    %34 = vector.multi_reduction <maximumf>, %33, %cst_22 [1] : vector<8x128xf32> to vector<8xf32>
    %35 = vector.shape_cast %34 : vector<8xf32> to vector<8x1xf32>
    %36 = vector.broadcast %35 : vector<8x1xf32> to vector<8x128xf32>
    %37 = arith.subf %33, %36 : vector<8x128xf32>
    %38 = math.exp %37 : vector<8x128xf32>
    %cst_23 = arith.constant dense<0.000000e+00> : vector<8xf32>
    %39 = vector.multi_reduction <add>, %38, %cst_23 [1] : vector<8x128xf32> to vector<8xf32>
    %40 = vector.shape_cast %39 : vector<8xf32> to vector<8x1xf32>
    %41 = vector.broadcast %40 : vector<8x1xf32> to vector<8x128xf32>
    %42 = arith.divf %38, %41 : vector<8x128xf32>
    %c0_24 = arith.constant 0 : index
    %c0_25 = arith.constant 0 : index
    %43 = vector.load %arg9[%c0_24, %c0_25] : memref<8x128xf32, #tpu.memory_space<vmem>>, vector<8x128xf32>
    tpu.vector_store %arg9[%c0_24, %c0_25], %42 {strides = array<i32>} : memref<8x128xf32, #tpu.memory_space<vmem>>, vector<8x128xf32>,
    return
  }
  func.func @transform_0(%arg0: i32) -> (i32, i32) {
    %c0_i32 = arith.constant 0 : i32
    %c0_i32_0 = arith.constant 0 : i32
    return %arg0, %c0_i32 : i32, i32
  }
  func.func @transform_1(%arg0: i32) -> (i32, i32, i32) {
    %c0_i32 = arith.constant 0 : i32
    %c0_i32_0 = arith.constant 0 : i32
    %c0_i32_1 = arith.constant 0 : i32
    return %arg0, %c0_i32, %c0_i32_0 : i32, i32, i32
  }
  func.func @transform_2(%arg0: i32) -> (i32, i32) {
    %c0_i32 = arith.constant 0 : i32
    %c0_i32_0 = arith.constant 0 : i32
    return %arg0, %c0_i32 : i32, i32
  }
  func.func @transform_3(%arg0: i32) -> (i32, i32) {
    %c0_i32 = arith.constant 0 : i32
    %c0_i32_0 = arith.constant 0 : i32
    %c0_i32_1 = arith.constant 0 : i32
    return %c0_i32, %c0_i32_0 : i32, i32
  }
  func.func @transform_4(%arg0: i32) -> (i32, i32) {
    %c0_i32 = arith.constant 0 : i32
    %c0_i32_0 = arith.constant 0 : i32
    %c0_i32_1 = arith.constant 0 : i32
    return %c0_i32, %c0_i32_0 : i32, i32
  }
  func.func @transform_5(%arg0: i32) -> (i32, i32) {
    %c0_i32 = arith.constant 0 : i32
    %c0_i32_0 = arith.constant 0 : i32
    %c0_i32_1 = arith.constant 0 : i32
    return %c0_i32, %c0_i32_0 : i32, i32
  }
  func.func @transform_6(%arg0: i32) -> (i32, i32) {
    %c0_i32 = arith.constant 0 : i32
    %c0_i32_0 = arith.constant 0 : i32
    %c0_i32_1 = arith.constant 0 : i32
    return %c0_i32, %c0_i32_0 : i32, i32
  }
  func.func @transform_7(%arg0: i32) -> (i32, i32) {
    %c0_i32 = arith.constant 0 : i32
    %c0_i32_0 = arith.constant 0 : i32
    %c0_i32_1 = arith.constant 0 : i32
    return %c0_i32, %c0_i32_0 : i32, i32
  }
  func.func @transform_8(%arg0: i32) -> (i32, i32) {
    %c0_i32 = arith.constant 0 : i32
    %c0_i32_0 = arith.constant 0 : i32
    return %arg0, %c0_i32 : i32, i32
  }
}

</mosaic_0001>

<llo_original>
// kernel: tpu_custom_call.1
$region0: #{tpu_custom_call.1}
  #allocation0 [shape = 'u32[]', space=smem, size = 0x4, offset = 0x4, fixed_abs, tag = 'smem constant byte address 0x4 - core index']
  #allocation1 [shape = 'u32[144,128]{1,0:T(1,128)}', space=vmem, size = 0x12000, scoped, tag = 'internal scratch']
  #allocation2 [shape = 'f32[8,128]{1,0:T(8,128)}', space=vmem, size = 0x1000, scoped, tag = 'scratch operand']
  %s0 = inlined_call_operand.vmem [shape: f32[8,32], index: 0, kind: input, shape index: {}]
  %s1 = inlined_call_operand.vmem [shape: f32[8,128,32], index: 1, kind: input, shape index: {}]
  %s2 = inlined_call_operand.vmem [shape: f32[8,128], index: 2, kind: input, shape index: {}]
  %s3 = inlined_call_operand.vmem [shape: f32[1,128], index: 3, kind: input, shape index: {}]
  %s4 = inlined_call_operand.vmem [shape: f32[32,128], index: 4, kind: input, shape index: {}]
  %s5 = inlined_call_operand.vmem [shape: f32[32,128], index: 5, kind: input, shape index: {}]
  %s6 = inlined_call_operand.vmem [shape: f32[1,128], index: 6, kind: input, shape index: {}]
  %s7 = inlined_call_operand.vmem [shape: f32[1,128], index: 7, kind: input, shape index: {}]
  %s8 = inlined_call_operand.hbm [shape: f32[8,128], index: 8, kind: output, shape index: {}]
  %s9 = sld [smem:[#allocation0]]
  $region42: #{tpu_custom_call.1} parent=0
    _
  %s11 = ssub.s32 1, %s9
  %s12 = scalar_select 0, %s11, %s9
  $region1: #{tpu_custom_call.1} parent=0
    #allocation3 [shape = 'u8[4096]{0}', space=vmem, size = 0x1000, scoped, tag = 'output window, operand 0, single buffered']
    #allocation4 [shape = 's32[1]{0}', space=sflag, size = 0x4, scoped, tag = 'scoped memory for tpu_custom_call.1']
    %13 = vsyncpa [#allocation4], 0
    // Predicated region
    $region2: #{tpu_custom_call.1} parent=1 // pred_check
      _
    $region3: #{tpu_custom_call.1} parent=1 // pred_check_branch
      %15 = sbr.rel (0) target = $region5
    $region4: #{tpu_custom_call.1} parent=1 // pred_region
      _
    $region5: #{tpu_custom_call.1} parent=1 // pred_fallthru
      _
    // Predicated region
    $region6: #{tpu_custom_call.1} parent=1 // pred_check
      _
    $region7: #{tpu_custom_call.1} parent=1 // pred_check_branch
      %17 = sbr.rel (0) target = $region9
    $region8: #{tpu_custom_call.1} parent=1 // pred_region
      _
    $region9: #{tpu_custom_call.1} parent=1 // pred_fallthru
      _
    // Predicated region
    $region10: #{tpu_custom_call.1} parent=1 // pred_check
      _
    $region11: #{tpu_custom_call.1} parent=1 // pred_check_branch
      %19 = sbr.rel (0) target = $region13
    $region12: #{tpu_custom_call.1} parent=1 // pred_region
      _
    $region13: #{tpu_custom_call.1} parent=1 // pred_fallthru
      _
    // Predicated region
    $region14: #{tpu_custom_call.1} parent=1 // pred_check
      _
    $region15: #{tpu_custom_call.1} parent=1 // pred_check_branch
      %21 = sbr.rel (0) target = $region17
    $region16: #{tpu_custom_call.1} parent=1 // pred_region
      _
    $region17: #{tpu_custom_call.1} parent=1 // pred_fallthru
      _
    // Predicated region
    $region18: #{tpu_custom_call.1} parent=1 // pred_check
      _
    $region19: #{tpu_custom_call.1} parent=1 // pred_check_branch
      %23 = sbr.rel (0) target = $region21
    $region20: #{tpu_custom_call.1} parent=1 // pred_region
      _
    $region21: #{tpu_custom_call.1} parent=1 // pred_fallthru
      _
    // Predicated region
    $region22: #{tpu_custom_call.1} parent=1 // pred_check
      _
    $region23: #{tpu_custom_call.1} parent=1 // pred_check_branch
      %25 = sbr.rel (0) target = $region25
    $region24: #{tpu_custom_call.1} parent=1 // pred_region
      _
    $region25: #{tpu_custom_call.1} parent=1 // pred_fallthru
      _
    // Predicated region
    $region26: #{tpu_custom_call.1} parent=1 // pred_check
      _
    $region27: #{tpu_custom_call.1} parent=1 // pred_check_branch
      %27 = sbr.rel (0) target = $region29
    $region28: #{tpu_custom_call.1} parent=1 // pred_region
      _
    $region29: #{tpu_custom_call.1} parent=1 // pred_fallthru
      _
    // Predicated region
    $region30: #{tpu_custom_call.1} parent=1 // pred_check
      _
    $region31: #{tpu_custom_call.1} parent=1 // pred_check_branch
      %29 = sbr.rel (0) target = $region33
    $region32: #{tpu_custom_call.1} parent=1 // pred_region
      _
    $region33: #{tpu_custom_call.1} parent=1 // pred_fallthru
      _
    %v30 = vld [vmem:[%s0] sm:$0xff]
    %v31 = vld [vmem:[%s4] sm:$0xff]
    %v32 = vld [vmem:[%s4 + $0x8] sm:$0xff]
    %v33 = vld [vmem:[%s4 + $0x10] sm:$0xff]
    %v34 = vld [vmem:[%s4 + $0x18] sm:$0xff]
    %v35 = vld [vmem:[%s5] sm:$0xff]
    %v36 = vld [vmem:[%s5 + $0x8] sm:$0xff]
    %v37 = vld [vmem:[%s5 + $0x10] sm:$0xff]
    %v38 = vld [vmem:[%s5 + $0x18] sm:$0xff]
    %v39 = vld [vmem:[%s6] sm:$0x1]
    %v40 = vld [vmem:[%s7] sm:$0x1]
    %v42 = vlaneseq
    %v43 = vshrl.u32 %v42, 7
    %v44 = vsub.s32 0, %v43
    %v45 = vrot.slane %v39, %v44
    %vm47 = vcmask 261120
    %v49 = vsel %vm47, %v30, 0
    %51 = vmatprep.subr.mxu0 0.0
    %52 = vmatpush1.msra.mxu0 %v31
    %53 = vmatprep.subr.mxu0 0.0
    %54 = vmatpush1.msra.mxu0 %v32
    %55 = vmatprep.subr.mxu0 0.0
    %56 = vmatpush1.msra.mxu0 %v33
    %57 = vmatprep.subr.mxu0 0.0
    %58 = vmatpush1.msra.mxu0 %v34
    %59 = vmatprep.subr.mxu0 0.0
    %60 = vmatpush1.msra.mxu0 0.0
    %61 = vmatprep.subr.mxu0 0.0
    %62 = vmatpush1.msra.mxu0 0.0
    %63 = vmatprep.subr.mxu0 0.0
    %64 = vmatpush1.msra.mxu0 0.0
    %65 = vmatprep.subr.mxu0 0.0
    %66 = vmatpush1.msra.mxu0 0.0
    %67 = vmatprep.subr.mxu0 0.0
    %68 = vmatpush1.msra.mxu0 0.0
    %69 = vmatprep.subr.mxu0 0.0
    %70 = vmatpush1.msra.mxu0 0.0
    %71 = vmatprep.subr.mxu0 0.0
    %72 = vmatpush1.msra.mxu0 0.0
    %73 = vmatprep.subr.mxu0 0.0
    %74 = vmatpush1.msra.mxu0 0.0
    %75 = vmatprep.subr.mxu0 0.0
    %76 = vmatpush1.msra.mxu0 0.0
    %77 = vmatprep.subr.mxu0 0.0
    %78 = vmatpush1.msra.mxu0 0.0
    %79 = vmatprep.subr.mxu0 0.0
    %80 = vmatpush1.msra.mxu0 0.0
    %81 = vmatprep.subr.mxu0 0.0
    %82 = vmatpush1.msra.mxu0 0.0
    %83 = vmatprep.subr.mxu0 0.0
    %84 = vmatpush1.msra.mxu0 0.0
    %85 = vmatprep.subr.mxu0 0.0
    %86 = vmatpush1.msra.mxu0 0.0
    %87 = vmatprep.subr.mxu0 0.0
    %88 = vmatpush1.msra.mxu0 0.0
    %89 = vmatprep.subr.mxu0 0.0
    %90 = vmatpush1.msra.mxu0 0.0
    %91 = vmatprep.subr.mxu0 0.0
    %92 = vmatpush1.msra.mxu0 0.0
    %93 = vmatprep.subr.mxu0 0.0
    %94 = vmatpush1.msra.mxu0 0.0
    %95 = vmatprep.subr.mxu0 0.0
    %96 = vmatpush1.msra.mxu0 0.0
    %97 = vmatprep.subr.mxu0 0.0
    %98 = vmatpush1.msra.mxu0 0.0
    %99 = vmatprep.subr.mxu0 0.0
    %100 = vmatpush1.msra.mxu0 0.0
    %101 = vmatprep.subr.mxu0 0.0
    %102 = vmatpush1.msra.mxu0 0.0
    %103 = vmatprep.subr.mxu0 0.0
    %104 = vmatpush1.msra.mxu0 0.0
    %105 = vmatprep.subr.mxu0 0.0
    %106 = vmatpush1.msra.mxu0 0.0
    %107 = vmatprep.subr.mxu0 0.0
    %108 = vmatpush1.msra.mxu0 0.0
    %109 = vmatprep.subr.mxu0 0.0
    %110 = vmatpush1.msra.mxu0 0.0
    %111 = vmatprep.subr.mxu0 0.0
    %112 = vmatpush1.msra.mxu0 0.0
    %113 = vmatprep.subr.mxu0 0.0
    %114 = vmatpush1.msra.mxu0 0.0
    %115 = vmatprep.mubr.f32.mxu0 0.0
    %116 = vmatmul.mubr.f32.gmra.mrb[0].mxu0 %v49
    %v117 = vpop.f32.mrb[0].mxu0
    %v118 = vadd.f32 %v45, %v117
    %v119 = vpop.f32.mrb[0].mxu0
    %120 = vdwg.mxu0
    %v122 = vcombine.high %v118, %v118
    %v124 = vunpack.c.l.s4 1966171168
    %v125 = vunpack.c.0.s8 %v124
    %v126 = vlaneseq
    %v127 = vshrl.u32 %v126, 7
    %v128 = vsub.s32 %v125, %v127
    %v129 = vrot.slane %v118, %v128
    %v131 = vunpack.c.l.s4 1966171168
    %v132 = vunpack.c.0.s8 %v131
    %v133 = vlaneseq
    %v134 = vshrl.u32 %v133, 7
    %v135 = vsub.s32 %v132, %v134
    %v136 = vrot.slane %v122, %v135
    %v137 = vcombine.high %v129, %v129
    %v138 = vcombine.high %v136, %v136
    %v140 = vunpack.c.l.s4 1966171168
    %v141 = vunpack.c.0.s8 %v140
    %v142 = vlaneseq
    %v143 = vshrl.u32 %v142, 7
    %v144 = vsub.s32 %v141, %v143
    %v145 = vrot.slane %v129, %v144
    %v147 = vunpack.c.l.s4 1966171168
    %v148 = vunpack.c.0.s8 %v147
    %v149 = vlaneseq
    %v150 = vshrl.u32 %v149, 7
    %v151 = vsub.s32 %v148, %v150
    %v152 = vrot.slane %v136, %v151
    %v154 = vunpack.c.l.s4 1966171168
    %v155 = vunpack.c.0.s8 %v154
    %v156 = vlaneseq
    %v157 = vshrl.u32 %v156, 7
    %v158 = vsub.s32 %v155, %v157
    %v159 = vrot.slane %v137, %v158
    %v161 = vunpack.c.l.s4 1966171168
    %v162 = vunpack.c.0.s8 %v161
    %v163 = vlaneseq
    %v164 = vshrl.u32 %v163, 7
    %v165 = vsub.s32 %v162, %v164
    %v166 = vrot.slane %v138, %v165
    %v167 = vcombine.high %v145, %v145
    %v168 = vcombine.high %v152, %v152
    %v169 = vcombine.high %v159, %v159
    %v170 = vcombine.high %v166, %v166
    %v171 = vld [vmem:[%s1] sm:$0xff]
    %v172 = vld [vmem:[%s1 + $0x8] sm:$0xff]
    %v173 = vld [vmem:[%s1 + $0x10] sm:$0xff]
    %v174 = vld [vmem:[%s1 + $0x18] sm:$0xff]
    %v175 = vld [vmem:[%s1 + $0x20] sm:$0xff]
    %v176 = vld [vmem:[%s1 + $0x28] sm:$0xff]
    %v177 = vld [vmem:[%s1 + $0x30] sm:$0xff]
    %v178 = vld [vmem:[%s1 + $0x38] sm:$0xff]
    %v179 = vld [vmem:[%s1 + $0x40] sm:$0xff]
    %v180 = vld [vmem:[%s1 + $0x48] sm:$0xff]
    %v181 = vld [vmem:[%s1 + $0x50] sm:$0xff]
    %v182 = vld [vmem:[%s1 + $0x58] sm:$0xff]
    %v183 = vld [vmem:[%s1 + $0x60] sm:$0xff]
    %v184 = vld [vmem:[%s1 + $0x68] sm:$0xff]
    %v185 = vld [vmem:[%s1 + $0x70] sm:$0xff]
    %v186 = vld [vmem:[%s1 + $0x78] sm:$0xff]
    %v187 = vld [vmem:[%s1 + $0x80] sm:$0xff]
    %v188 = vld [vmem:[%s1 + $0x88] sm:$0xff]
    %v189 = vld [vmem:[%s1 + $0x90] sm:$0xff]
    %v190 = vld [vmem:[%s1 + $0x98] sm:$0xff]
    %v191 = vld [vmem:[%s1 + $0xa0] sm:$0xff]
    %v192 = vld [vmem:[%s1 + $0xa8] sm:$0xff]
    %v193 = vld [vmem:[%s1 + $0xb0] sm:$0xff]
    %v194 = vld [vmem:[%s1 + $0xb8] sm:$0xff]
    %v195 = vld [vmem:[%s1 + $0xc0] sm:$0xff]
    %v196 = vld [vmem:[%s1 + $0xc8] sm:$0xff]
    %v197 = vld [vmem:[%s1 + $0xd0] sm:$0xff]
    %v198 = vld [vmem:[%s1 + $0xd8] sm:$0xff]
    %v199 = vld [vmem:[%s1 + $0xe0] sm:$0xff]
    %v200 = vld [vmem:[%s1 + $0xe8] sm:$0xff]
    %v201 = vld [vmem:[%s1 + $0xf0] sm:$0xff]
    %v202 = vld [vmem:[%s1 + $0xf8] sm:$0xff]
    %v203 = vld [vmem:[%s1 + $0x100] sm:$0xff]
    %v204 = vld [vmem:[%s1 + $0x108] sm:$0xff]
    %v205 = vld [vmem:[%s1 + $0x110] sm:$0xff]
    %v206 = vld [vmem:[%s1 + $0x118] sm:$0xff]
    %v207 = vld [vmem:[%s1 + $0x120] sm:$0xff]
    %v208 = vld [vmem:[%s1 + $0x128] sm:$0xff]
    %v209 = vld [vmem:[%s1 + $0x130] sm:$0xff]
    %v210 = vld [vmem:[%s1 + $0x138] sm:$0xff]
    %v211 = vld [vmem:[%s1 + $0x140] sm:$0xff]
    %v212 = vld [vmem:[%s1 + $0x148] sm:$0xff]
    %v213 = vld [vmem:[%s1 + $0x150] sm:$0xff]
    %v214 = vld [vmem:[%s1 + $0x158] sm:$0xff]
    %v215 = vld [vmem:[%s1 + $0x160] sm:$0xff]
    %v216 = vld [vmem:[%s1 + $0x168] sm:$0xff]
    %v217 = vld [vmem:[%s1 + $0x170] sm:$0xff]
    %v218 = vld [vmem:[%s1 + $0x178] sm:$0xff]
    %v219 = vld [vmem:[%s1 + $0x180] sm:$0xff]
    %v220 = vld [vmem:[%s1 + $0x188] sm:$0xff]
    %v221 = vld [vmem:[%s1 + $0x190] sm:$0xff]
    %v222 = vld [vmem:[%s1 + $0x198] sm:$0xff]
    %v223 = vld [vmem:[%s1 + $0x1a0] sm:$0xff]
    %v224 = vld [vmem:[%s1 + $0x1a8] sm:$0xff]
    %v225 = vld [vmem:[%s1 + $0x1b0] sm:$0xff]
    %v226 = vld [vmem:[%s1 + $0x1b8] sm:$0xff]
    %v227 = vld [vmem:[%s1 + $0x1c0] sm:$0xff]
    %v228 = vld [vmem:[%s1 + $0x1c8] sm:$0xff]
    %v229 = vld [vmem:[%s1 + $0x1d0] sm:$0xff]
    %v230 = vld [vmem:[%s1 + $0x1d8] sm:$0xff]
    %v231 = vld [vmem:[%s1 + $0x1e0] sm:$0xff]
    %v232 = vld [vmem:[%s1 + $0x1e8] sm:$0xff]
    %v233 = vld [vmem:[%s1 + $0x1f0] sm:$0xff]
    %v234 = vld [vmem:[%s1 + $0x1f8] sm:$0xff]
    %v235 = vld [vmem:[%s1 + $0x200] sm:$0xff]
    %v236 = vld [vmem:[%s1 + $0x208] sm:$0xff]
    %v237 = vld [vmem:[%s1 + $0x210] sm:$0xff]
    %v238 = vld [vmem:[%s1 + $0x218] sm:$0xff]
    %v239 = vld [vmem:[%s1 + $0x220] sm:$0xff]
    %v240 = vld [vmem:[%s1 + $0x228] sm:$0xff]
    %v241 = vld [vmem:[%s1 + $0x230] sm:$0xff]
    %v242 = vld [vmem:[%s1 + $0x238] sm:$0xff]
    %v243 = vld [vmem:[%s1 + $0x240] sm:$0xff]
    %v244 = vld [vmem:[%s1 + $0x248] sm:$0xff]
    %v245 = vld [vmem:[%s1 + $0x250] sm:$0xff]
    %v246 = vld [vmem:[%s1 + $0x258] sm:$0xff]
    %v247 = vld [vmem:[%s1 + $0x260] sm:$0xff]
    %v248 = vld [vmem:[%s1 + $0x268] sm:$0xff]
    %v249 = vld [vmem:[%s1 + $0x270] sm:$0xff]
    %v250 = vld [vmem:[%s1 + $0x278] sm:$0xff]
    %v251 = vld [vmem:[%s1 + $0x280] sm:$0xff]
    %v252 = vld [vmem:[%s1 + $0x288] sm:$0xff]
    %v253 = vld [vmem:[%s1 + $0x290] sm:$0xff]
    %v254 = vld [vmem:[%s1 + $0x298] sm:$0xff]
    %v255 = vld [vmem:[%s1 + $0x2a0] sm:$0xff]
    %v256 = vld [vmem:[%s1 + $0x2a8] sm:$0xff]
    %v257 = vld [vmem:[%s1 + $0x2b0] sm:$0xff]
    %v258 = vld [vmem:[%s1 + $0x2b8] sm:$0xff]
    %v259 = vld [vmem:[%s1 + $0x2c0] sm:$0xff]
    %v260 = vld [vmem:[%s1 + $0x2c8] sm:$0xff]
    %v261 = vld [vmem:[%s1 + $0x2d0] sm:$0xff]
    %v262 = vld [vmem:[%s1 + $0x2d8] sm:$0xff]
    %v263 = vld [vmem:[%s1 + $0x2e0] sm:$0xff]
    %v264 = vld [vmem:[%s1 + $0x2e8] sm:$0xff]
    %v265 = vld [vmem:[%s1 + $0x2f0] sm:$0xff]
    %v266 = vld [vmem:[%s1 + $0x2f8] sm:$0xff]
    %v267 = vld [vmem:[%s1 + $0x300] sm:$0xff]
    %v268 = vld [vmem:[%s1 + $0x308] sm:$0xff]
    %v269 = vld [vmem:[%s1 + $0x310] sm:$0xff]
    %v270 = vld [vmem:[%s1 + $0x318] sm:$0xff]
    %v271 = vld [vmem:[%s1 + $0x320] sm:$0xff]
    %v272 = vld [vmem:[%s1 + $0x328] sm:$0xff]
    %v273 = vld [vmem:[%s1 + $0x330] sm:$0xff]
    %v274 = vld [vmem:[%s1 + $0x338] sm:$0xff]
    %v275 = vld [vmem:[%s1 + $0x340] sm:$0xff]
    %v276 = vld [vmem:[%s1 + $0x348] sm:$0xff]
    %v277 = vld [vmem:[%s1 + $0x350] sm:$0xff]
    %v278 = vld [vmem:[%s1 + $0x358] sm:$0xff]
    %v279 = vld [vmem:[%s1 + $0x360] sm:$0xff]
    %v280 = vld [vmem:[%s1 + $0x368] sm:$0xff]
    %v281 = vld [vmem:[%s1 + $0x370] sm:$0xff]
    %v282 = vld [vmem:[%s1 + $0x378] sm:$0xff]
    %v283 = vld [vmem:[%s1 + $0x380] sm:$0xff]
    %v284 = vld [vmem:[%s1 + $0x388] sm:$0xff]
    %v285 = vld [vmem:[%s1 + $0x390] sm:$0xff]
    %v286 = vld [vmem:[%s1 + $0x398] sm:$0xff]
    %v287 = vld [vmem:[%s1 + $0x3a0] sm:$0xff]
    %v288 = vld [vmem:[%s1 + $0x3a8] sm:$0xff]
    %v289 = vld [vmem:[%s1 + $0x3b0] sm:$0xff]
    %v290 = vld [vmem:[%s1 + $0x3b8] sm:$0xff]
    %v291 = vld [vmem:[%s1 + $0x3c0] sm:$0xff]
    %v292 = vld [vmem:[%s1 + $0x3c8] sm:$0xff]
    %v293 = vld [vmem:[%s1 + $0x3d0] sm:$0xff]
    %v294 = vld [vmem:[%s1 + $0x3d8] sm:$0xff]
    %v295 = vld [vmem:[%s1 + $0x3e0] sm:$0xff]
    %v296 = vld [vmem:[%s1 + $0x3e8] sm:$0xff]
    %v297 = vld [vmem:[%s1 + $0x3f0] sm:$0xff]
    %v298 = vld [vmem:[%s1 + $0x3f8] sm:$0xff]
    %v300 = vsel %vm47, %v171, 0
    %v303 = vsel %vm47, %v172, 0
    %v306 = vsel %vm47, %v173, 0
    %v309 = vsel %vm47, %v174, 0
    %v312 = vsel %vm47, %v175, 0
    %v315 = vsel %vm47, %v176, 0
    %v318 = vsel %vm47, %v177, 0
    %v321 = vsel %vm47, %v178, 0
    %v324 = vsel %vm47, %v179, 0
    %v327 = vsel %vm47, %v180, 0
    %v330 = vsel %vm47, %v181, 0
    %v333 = vsel %vm47, %v182, 0
    %v336 = vsel %vm47, %v183, 0
    %v339 = vsel %vm47, %v184, 0
    %v342 = vsel %vm47, %v185, 0
    %v345 = vsel %vm47, %v186, 0
    %v348 = vsel %vm47, %v187, 0
    %v351 = vsel %vm47, %v188, 0
    %v354 = vsel %vm47, %v189, 0
    %v357 = vsel %vm47, %v190, 0
    %v360 = vsel %vm47, %v191, 0
    %v363 = vsel %vm47, %v192, 0
    %v366 = vsel %vm47, %v193, 0
    %v369 = vsel %vm47, %v194, 0
    %v372 = vsel %vm47, %v195, 0
    %v375 = vsel %vm47, %v196, 0
    %v378 = vsel %vm47, %v197, 0
    %v381 = vsel %vm47, %v198, 0
    %v384 = vsel %vm47, %v199, 0
    %v387 = vsel %vm47, %v200, 0
    %v390 = vsel %vm47, %v201, 0
    %v393 = vsel %vm47, %v202, 0
    %v396 = vsel %vm47, %v203, 0
    %v399 = vsel %vm47, %v204, 0
    %v402 = vsel %vm47, %v205, 0
    %v405 = vsel %vm47, %v206, 0
    %v408 = vsel %vm47, %v207, 0
    %v411 = vsel %vm47, %v208, 0
    %v414 = vsel %vm47, %v209, 0
    %v417 = vsel %vm47, %v210, 0
    %v420 = vsel %vm47, %v211, 0
    %v423 = vsel %vm47, %v212, 0
    %v426 = vsel %vm47, %v213, 0
    %v429 = vsel %vm47, %v214, 0
    %v432 = vsel %vm47, %v215, 0
    %v435 = vsel %vm47, %v216, 0
    %v438 = vsel %vm47, %v217, 0
    %v441 = vsel %vm47, %v218, 0
    %v444 = vsel %vm47, %v219, 0
    %v447 = vsel %vm47, %v220, 0
    %v450 = vsel %vm47, %v221, 0
    %v453 = vsel %vm47, %v222, 0
    %v456 = vsel %vm47, %v223, 0
    %v459 = vsel %vm47, %v224, 0
    %v462 = vsel %vm47, %v225, 0
    %v465 = vsel %vm47, %v226, 0
    %v468 = vsel %vm47, %v227, 0
    %v471 = vsel %vm47, %v228, 0
    %v474 = vsel %vm47, %v229, 0
    %v477 = vsel %vm47, %v230, 0
    %v480 = vsel %vm47, %v231, 0
    %v483 = vsel %vm47, %v232, 0
    %v486 = vsel %vm47, %v233, 0
    %v489 = vsel %vm47, %v234, 0
    %v492 = vsel %vm47, %v235, 0
    %v495 = vsel %vm47, %v236, 0
    %v498 = vsel %vm47, %v237, 0
    %v501 = vsel %vm47, %v238, 0
    %v504 = vsel %vm47, %v239, 0
    %v507 = vsel %vm47, %v240, 0
    %v510 = vsel %vm47, %v241, 0
    %v513 = vsel %vm47, %v242, 0
    %v516 = vsel %vm47, %v243, 0
    %v519 = vsel %vm47, %v244, 0
    %v522 = vsel %vm47, %v245, 0
    %v525 = vsel %vm47, %v246, 0
    %v528 = vsel %vm47, %v247, 0
    %v531 = vsel %vm47, %v248, 0
    %v534 = vsel %vm47, %v249, 0
    %v537 = vsel %vm47, %v250, 0
    %v540 = vsel %vm47, %v251, 0
    %v543 = vsel %vm47, %v252, 0
    %v546 = vsel %vm47, %v253, 0
    %v549 = vsel %vm47, %v254, 0
    %v552 = vsel %vm47, %v255, 0
    %v555 = vsel %vm47, %v256, 0
    %v558 = vsel %vm47, %v257, 0
    %v561 = vsel %vm47, %v258, 0
    %v564 = vsel %vm47, %v259, 0
    %v567 = vsel %vm47, %v260, 0
    %v570 = vsel %vm47, %v261, 0
    %v573 = vsel %vm47, %v262, 0
    %v576 = vsel %vm47, %v263, 0
    %v579 = vsel %vm47, %v264, 0
    %v582 = vsel %vm47, %v265, 0
    %v585 = vsel %vm47, %v266, 0
    %v588 = vsel %vm47, %v267, 0
    %v591 = vsel %vm47, %v268, 0
    %v594 = vsel %vm47, %v269, 0
    %v597 = vsel %vm47, %v270, 0
    %v600 = vsel %vm47, %v271, 0
    %v603 = vsel %vm47, %v272, 0
    %v606 = vsel %vm47, %v273, 0
    %v609 = vsel %vm47, %v274, 0
    %v612 = vsel %vm47, %v275, 0
    %v615 = vsel %vm47, %v276, 0
    %v618 = vsel %vm47, %v277, 0
    %v621 = vsel %vm47, %v278, 0
    %v624 = vsel %vm47, %v279, 0
    %v627 = vsel %vm47, %v280, 0
    %v630 = vsel %vm47, %v281, 0
    %v633 = vsel %vm47, %v282, 0
    %v636 = vsel %vm47, %v283, 0
    %v639 = vsel %vm47, %v284, 0
    %v642 = vsel %vm47, %v285, 0
    %v645 = vsel %vm47, %v286, 0
    %v648 = vsel %vm47, %v287, 0
    %v651 = vsel %vm47, %v288, 0
    %v654 = vsel %vm47, %v289, 0
    %v657 = vsel %vm47, %v290, 0
    %v660 = vsel %vm47, %v291, 0
    %v663 = vsel %vm47, %v292, 0
    %v666 = vsel %vm47, %v293, 0
    %v669 = vsel %vm47, %v294, 0
    %v672 = vsel %vm47, %v295, 0
    %v675 = vsel %vm47, %v296, 0
    %v678 = vsel %vm47, %v297, 0
    %v681 = vsel %vm47, %v298, 0
    %683 = vmatprep.subr.mxu0 0.0
    %684 = vmatpush1.msra.mxu0 %v35
    %685 = vmatprep.subr.mxu0 0.0
    %686 = vmatpush1.msra.mxu0 %v36
    %687 = vmatprep.subr.mxu0 0.0
    %688 = vmatpush1.msra.mxu0 %v37
    %689 = vmatprep.subr.mxu0 0.0
    %690 = vmatpush1.msra.mxu0 %v38
    %691 = vmatprep.subr.mxu0 0.0
    %692 = vmatpush1.msra.mxu0 0.0
    %693 = vmatprep.subr.mxu0 0.0
    %694 = vmatpush1.msra.mxu0 0.0
    %695 = vmatprep.subr.mxu0 0.0
    %696 = vmatpush1.msra.mxu0 0.0
    %697 = vmatprep.subr.mxu0 0.0
    %698 = vmatpush1.msra.mxu0 0.0
    %699 = vmatprep.subr.mxu0 0.0
    %700 = vmatpush1.msra.mxu0 0.0
    %701 = vmatprep.subr.mxu0 0.0
    %702 = vmatpush1.msra.mxu0 0.0
    %703 = vmatprep.subr.mxu0 0.0
    %704 = vmatpush1.msra.mxu0 0.0
    %705 = vmatprep.subr.mxu0 0.0
    %706 = vmatpush1.msra.mxu0 0.0
    %707 = vmatprep.subr.mxu0 0.0
    %708 = vmatpush1.msra.mxu0 0.0
    %709 = vmatprep.subr.mxu0 0.0
    %710 = vmatpush1.msra.mxu0 0.0
    %711 = vmatprep.subr.mxu0 0.0
    %712 = vmatpush1.msra.mxu0 0.0
    %713 = vmatprep.subr.mxu0 0.0
    %714 = vmatpush1.msra.mxu0 0.0
    %715 = vmatprep.subr.mxu0 0.0
    %716 = vmatpush1.msra.mxu0 0.0
    %717 = vmatprep.subr.mxu0 0.0
    %718 = vmatpush1.msra.mxu0 0.0
    %719 = vmatprep.subr.mxu0 0.0
    %720 = vmatpush1.msra.mxu0 0.0
    %721 = vmatprep.subr.mxu0 0.0
    %722 = vmatpush1.msra.mxu0 0.0
    %723 = vmatprep.subr.mxu0 0.0
    %724 = vmatpush1.msra.mxu0 0.0
    %725 = vmatprep.subr.mxu0 0.0
    %726 = vmatpush1.msra.mxu0 0.0
    %727 = vmatprep.subr.mxu0 0.0
    %728 = vmatpush1.msra.mxu0 0.0
    %729 = vmatprep.subr.mxu0 0.0
    %730 = vmatpush1.msra.mxu0 0.0
    %731 = vmatprep.subr.mxu0 0.0
    %732 = vmatpush1.msra.mxu0 0.0
    %733 = vmatprep.subr.mxu0 0.0
    %734 = vmatpush1.msra.mxu0 0.0
    %735 = vmatprep.subr.mxu0 0.0
    %736 = vmatpush1.msra.mxu0 0.0
    %737 = vmatprep.subr.mxu0 0.0
    %738 = vmatpush1.msra.mxu0 0.0
    %739 = vmatprep.subr.mxu0 0.0
    %740 = vmatpush1.msra.mxu0 0.0
    %741 = vmatprep.subr.mxu0 0.0
    %742 = vmatpush1.msra.mxu0 0.0
    %743 = vmatprep.subr.mxu0 0.0
    %744 = vmatpush1.msra.mxu0 0.0
    %745 = vmatprep.subr.mxu0 0.0
    %746 = vmatpush1.msra.mxu0 0.0
    %747 = vmatprep.mubr.f32.mxu0 0.0
    %748 = vmatmul.mubr.f32.gmra.mrb[0].mxu0 %v300
    %v749 = vpop.f32.mrb[0].mxu0
    %v750 = vadd.f32 0.0, %v749
    %v751 = vpop.f32.mrb[0].mxu0
    %752 = vmatprep.mubr.f32.mxu0 0.0
    %753 = vmatmul.mubr.f32.gmra.mrb[0].mxu0 %v303
    %v754 = vpop.f32.mrb[0].mxu0
    %v755 = vadd.f32 0.0, %v754
    %v756 = vpop.f32.mrb[0].mxu0
    %757 = vmatprep.mubr.f32.mxu0 0.0
    %758 = vmatmul.mubr.f32.gmra.mrb[0].mxu0 %v306
    %v759 = vpop.f32.mrb[0].mxu0
    %v760 = vadd.f32 0.0, %v759
    %v761 = vpop.f32.mrb[0].mxu0
    %762 = vmatprep.mubr.f32.mxu0 0.0
    %763 = vmatmul.mubr.f32.gmra.mrb[0].mxu0 %v309
    %v764 = vpop.f32.mrb[0].mxu0
    %v765 = vadd.f32 0.0, %v764
    %v766 = vpop.f32.mrb[0].mxu0
    %767 = vmatprep.mubr.f32.mxu0 0.0
    %768 = vmatmul.mubr.f32.gmra.mrb[0].mxu0 %v312
    %v769 = vpop.f32.mrb[0].mxu0
    %v770 = vadd.f32 0.0, %v769
    %v771 = vpop.f32.mrb[0].mxu0
    %772 = vmatprep.mubr.f32.mxu0 0.0
    %773 = vmatmul.mubr.f32.gmra.mrb[0].mxu0 %v315
    %v774 = vpop.f32.mrb[0].mxu0
    %v775 = vadd.f32 0.0, %v774
    %v776 = vpop.f32.mrb[0].mxu0
    %777 = vmatprep.mubr.f32.mxu0 0.0
    %778 = vmatmul.mubr.f32.gmra.mrb[0].mxu0 %v318
    %v779 = vpop.f32.mrb[0].mxu0
    %v780 = vadd.f32 0.0, %v779
    %v781 = vpop.f32.mrb[0].mxu0
    %782 = vmatprep.mubr.f32.mxu0 0.0
    %783 = vmatmul.mubr.f32.gmra.mrb[0].mxu0 %v321
    %v784 = vpop.f32.mrb[0].mxu0
    %v785 = vadd.f32 0.0, %v784
    %v786 = vpop.f32.mrb[0].mxu0
    %787 = vmatprep.mubr.f32.mxu0 0.0
    %788 = vmatmul.mubr.f32.gmra.mrb[0].mxu0 %v324
    %v789 = vpop.f32.mrb[0].mxu0
    %v790 = vadd.f32 0.0, %v789
    %v791 = vpop.f32.mrb[0].mxu0
    %792 = vmatprep.mubr.f32.mxu0 0.0
    %793 = vmatmul.mubr.f32.gmra.mrb[0].mxu0 %v327
    %v794 = vpop.f32.mrb[0].mxu0
    %v795 = vadd.f32 0.0, %v794
    %v796 = vpop.f32.mrb[0].mxu0
    %797 = vmatprep.mubr.f32.mxu0 0.0
    %798 = vmatmul.mubr.f32.gmra.mrb[0].mxu0 %v330
    %v799 = vpop.f32.mrb[0].mxu0
    %v800 = vadd.f32 0.0, %v799
    %v801 = vpop.f32.mrb[0].mxu0
    %802 = vmatprep.mubr.f32.mxu0 0.0
    %803 = vmatmul.mubr.f32.gmra.mrb[0].mxu0 %v333
    %v804 = vpop.f32.mrb[0].mxu0
    %v805 = vadd.f32 0.0, %v804
    %v806 = vpop.f32.mrb[0].mxu0
    %807 = vmatprep.mubr.f32.mxu0 0.0
    %808 = vmatmul.mubr.f32.gmra.mrb[0].mxu0 %v336
    %v809 = vpop.f32.mrb[0].mxu0
    %v810 = vadd.f32 0.0, %v809
    %v811 = vpop.f32.mrb[0].mxu0
    %812 = vmatprep.mubr.f32.mxu0 0.0
    %813 = vmatmul.mubr.f32.gmra.mrb[0].mxu0 %v339
    %v814 = vpop.f32.mrb[0].mxu0
    %v815 = vadd.f32 0.0, %v814
    %v816 = vpop.f32.mrb[0].mxu0
    %817 = vmatprep.mubr.f32.mxu0 0.0
    %818 = vmatmul.mubr.f32.gmra.mrb[0].mxu0 %v342
    %v819 = vpop.f32.mrb[0].mxu0
    %v820 = vadd.f32 0.0, %v819
    %v821 = vpop.f32.mrb[0].mxu0
    %822 = vmatprep.mubr.f32.mxu0 0.0
    %823 = vmatmul.mubr.f32.gmra.mrb[0].mxu0 %v345
    %v824 = vpop.f32.mrb[0].mxu0
    %v825 = vadd.f32 0.0, %v824
    %v826 = vpop.f32.mrb[0].mxu0
    %827 = vmatprep.mubr.f32.mxu0 0.0
    %828 = vmatmul.mubr.f32.gmra.mrb[0].mxu0 %v348
    %v829 = vpop.f32.mrb[0].mxu0
    %v830 = vadd.f32 0.0, %v829
    %v831 = vpop.f32.mrb[0].mxu0
    %832 = vmatprep.mubr.f32.mxu0 0.0
    %833 = vmatmul.mubr.f32.gmra.mrb[0].mxu0 %v351
    %v834 = vpop.f32.mrb[0].mxu0
    %v835 = vadd.f32 0.0, %v834
    %v836 = vpop.f32.mrb[0].mxu0
    %837 = vmatprep.mubr.f32.mxu0 0.0
    %838 = vmatmul.mubr.f32.gmra.mrb[0].mxu0 %v354
    %v839 = vpop.f32.mrb[0].mxu0
    %v840 = vadd.f32 0.0, %v839
    %v841 = vpop.f32.mrb[0].mxu0
    %842 = vmatprep.mubr.f32.mxu0 0.0
    %843 = vmatmul.mubr.f32.gmra.mrb[0].mxu0 %v357
    %v844 = vpop.f32.mrb[0].mxu0
    %v845 = vadd.f32 0.0, %v844
    %v846 = vpop.f32.mrb[0].mxu0
    %847 = vmatprep.mubr.f32.mxu0 0.0
    %848 = vmatmul.mubr.f32.gmra.mrb[0].mxu0 %v360
    %v849 = vpop.f32.mrb[0].mxu0
    %v850 = vadd.f32 0.0, %v849
    %v851 = vpop.f32.mrb[0].mxu0
    %852 = vmatprep.mubr.f32.mxu0 0.0
    %853 = vmatmul.mubr.f32.gmra.mrb[0].mxu0 %v363
    %v854 = vpop.f32.mrb[0].mxu0
    %v855 = vadd.f32 0.0, %v854
    %v856 = vpop.f32.mrb[0].mxu0
    %857 = vmatprep.mubr.f32.mxu0 0.0
    %858 = vmatmul.mubr.f32.gmra.mrb[0].mxu0 %v366
    %v859 = vpop.f32.mrb[0].mxu0
    %v860 = vadd.f32 0.0, %v859
    %v861 = vpop.f32.mrb[0].mxu0
    %862 = vmatprep.mubr.f32.mxu0 0.0
    %863 = vmatmul.mubr.f32.gmra.mrb[0].mxu0 %v369
    %v864 = vpop.f32.mrb[0].mxu0
    %v865 = vadd.f32 0.0, %v864
    %v866 = vpop.f32.mrb[0].mxu0
    %867 = vmatprep.mubr.f32.mxu0 0.0
    %868 = vmatmul.mubr.f32.gmra.mrb[0].mxu0 %v372
    %v869 = vpop.f32.mrb[0].mxu0
    %v870 = vadd.f32 0.0, %v869
    %v871 = vpop.f32.mrb[0].mxu0
    %872 = vmatprep.mubr.f32.mxu0 0.0
    %873 = vmatmul.mubr.f32.gmra.mrb[0].mxu0 %v375
    %v874 = vpop.f32.mrb[0].mxu0
    %v875 = vadd.f32 0.0, %v874
    %v876 = vpop.f32.mrb[0].mxu0
    %877 = vmatprep.mubr.f32.mxu0 0.0
    %878 = vmatmul.mubr.f32.gmra.mrb[0].mxu0 %v378
    %v879 = vpop.f32.mrb[0].mxu0
    %v880 = vadd.f32 0.0, %v879
    %v881 = vpop.f32.mrb[0].mxu0
    %882 = vmatprep.mubr.f32.mxu0 0.0
    %883 = vmatmul.mubr.f32.gmra.mrb[0].mxu0 %v381
    %v884 = vpop.f32.mrb[0].mxu0
    %v885 = vadd.f32 0.0, %v884
    %v886 = vpop.f32.mrb[0].mxu0
    %887 = vmatprep.mubr.f32.mxu0 0.0
    %888 = vmatmul.mubr.f32.gmra.mrb[0].mxu0 %v384
    %v889 = vpop.f32.mrb[0].mxu0
    %v890 = vadd.f32 0.0, %v889
    %v891 = vpop.f32.mrb[0].mxu0
    %892 = vmatprep.mubr.f32.mxu0 0.0
    %893 = vmatmul.mubr.f32.gmra.mrb[0].mxu0 %v387
    %v894 = vpop.f32.mrb[0].mxu0
    %v895 = vadd.f32 0.0, %v894
    %v896 = vpop.f32.mrb[0].mxu0
    %897 = vmatprep.mubr.f32.mxu0 0.0
    %898 = vmatmul.mubr.f32.gmra.mrb[0].mxu0 %v390
    %v899 = vpop.f32.mrb[0].mxu0
    %v900 = vadd.f32 0.0, %v899
    %v901 = vpop.f32.mrb[0].mxu0
    %902 = vmatprep.mubr.f32.mxu0 0.0
    %903 = vmatmul.mubr.f32.gmra.mrb[0].mxu0 %v393
    %v904 = vpop.f32.mrb[0].mxu0
    %v905 = vadd.f32 0.0, %v904
    %v906 = vpop.f32.mrb[0].mxu0
    %907 = vmatprep.mubr.f32.mxu0 0.0
    %908 = vmatmul.mubr.f32.gmra.mrb[0].mxu0 %v396
    %v909 = vpop.f32.mrb[0].mxu0
    %v910 = vadd.f32 0.0, %v909
    %v911 = vpop.f32.mrb[0].mxu0
    %912 = vmatprep.mubr.f32.mxu0 0.0
    %913 = vmatmul.mubr.f32.gmra.mrb[0].mxu0 %v399
    %v914 = vpop.f32.mrb[0].mxu0
    %v915 = vadd.f32 0.0, %v914
    %v916 = vpop.f32.mrb[0].mxu0
    %917 = vmatprep.mubr.f32.mxu0 0.0
    %918 = vmatmul.mubr.f32.gmra.mrb[0].mxu0 %v402
    %v919 = vpop.f32.mrb[0].mxu0
    %v920 = vadd.f32 0.0, %v919
    %v921 = vpop.f32.mrb[0].mxu0
    %922 = vmatprep.mubr.f32.mxu0 0.0
    %923 = vmatmul.mubr.f32.gmra.mrb[0].mxu0 %v405
    %v924 = vpop.f32.mrb[0].mxu0
    %v925 = vadd.f32 0.0, %v924
    %v926 = vpop.f32.mrb[0].mxu0
    %927 = vmatprep.mubr.f32.mxu0 0.0
    %928 = vmatmul.mubr.f32.gmra.mrb[0].mxu0 %v408
    %v929 = vpop.f32.mrb[0].mxu0
    %v930 = vadd.f32 0.0, %v929
    %v931 = vpop.f32.mrb[0].mxu0
    %932 = vmatprep.mubr.f32.mxu0 0.0
    %933 = vmatmul.mubr.f32.gmra.mrb[0].mxu0 %v411
    %v934 = vpop.f32.mrb[0].mxu0
    %v935 = vadd.f32 0.0, %v934
    %v936 = vpop.f32.mrb[0].mxu0
    %937 = vmatprep.mubr.f32.mxu0 0.0
    %938 = vmatmul.mubr.f32.gmra.mrb[0].mxu0 %v414
    %v939 = vpop.f32.mrb[0].mxu0
    %v940 = vadd.f32 0.0, %v939
    %v941 = vpop.f32.mrb[0].mxu0
    %942 = vmatprep.mubr.f32.mxu0 0.0
    %943 = vmatmul.mubr.f32.gmra.mrb[0].mxu0 %v417
    %v944 = vpop.f32.mrb[0].mxu0
    %v945 = vadd.f32 0.0, %v944
    %v946 = vpop.f32.mrb[0].mxu0
    %947 = vmatprep.mubr.f32.mxu0 0.0
    %948 = vmatmul.mubr.f32.gmra.mrb[0].mxu0 %v420
    %v949 = vpop.f32.mrb[0].mxu0
    %v950 = vadd.f32 0.0, %v949
    %v951 = vpop.f32.mrb[0].mxu0
    %952 = vmatprep.mubr.f32.mxu0 0.0
    %953 = vmatmul.mubr.f32.gmra.mrb[0].mxu0 %v423
    %v954 = vpop.f32.mrb[0].mxu0
    %v955 = vadd.f32 0.0, %v954
    %v956 = vpop.f32.mrb[0].mxu0
    %957 = vmatprep.mubr.f32.mxu0 0.0
    %958 = vmatmul.mubr.f32.gmra.mrb[0].mxu0 %v426
    %v959 = vpop.f32.mrb[0].mxu0
    %v960 = vadd.f32 0.0, %v959
    %v961 = vpop.f32.mrb[0].mxu0
    %962 = vmatprep.mubr.f32.mxu0 0.0
    %963 = vmatmul.mubr.f32.gmra.mrb[0].mxu0 %v429
    %v964 = vpop.f32.mrb[0].mxu0
    %v965 = vadd.f32 0.0, %v964
    %v966 = vpop.f32.mrb[0].mxu0
    %967 = vmatprep.mubr.f32.mxu0 0.0
    %968 = vmatmul.mubr.f32.gmra.mrb[0].mxu0 %v432
    %v969 = vpop.f32.mrb[0].mxu0
    %v970 = vadd.f32 0.0, %v969
    %v971 = vpop.f32.mrb[0].mxu0
    %972 = vmatprep.mubr.f32.mxu0 0.0
    %973 = vmatmul.mubr.f32.gmra.mrb[0].mxu0 %v435
    %v974 = vpop.f32.mrb[0].mxu0
    %v975 = vadd.f32 0.0, %v974
    %v976 = vpop.f32.mrb[0].mxu0
    %977 = vmatprep.mubr.f32.mxu0 0.0
    %978 = vmatmul.mubr.f32.gmra.mrb[0].mxu0 %v438
    %v979 = vpop.f32.mrb[0].mxu0
    %v980 = vadd.f32 0.0, %v979
    %v981 = vpop.f32.mrb[0].mxu0
    %982 = vmatprep.mubr.f32.mxu0 0.0
    %983 = vmatmul.mubr.f32.gmra.mrb[0].mxu0 %v441
    %v984 = vpop.f32.mrb[0].mxu0
    %v985 = vadd.f32 0.0, %v984
    %v986 = vpop.f32.mrb[0].mxu0
    %987 = vmatprep.mubr.f32.mxu0 0.0
    %988 = vmatmul.mubr.f32.gmra.mrb[0].mxu0 %v444
    %v989 = vpop.f32.mrb[0].mxu0
    %v990 = vadd.f32 0.0, %v989
    %v991 = vpop.f32.mrb[0].mxu0
    %992 = vmatprep.mubr.f32.mxu0 0.0
    %993 = vmatmul.mubr.f32.gmra.mrb[0].mxu0 %v447
    %v994 = vpop.f32.mrb[0].mxu0
    %v995 = vadd.f32 0.0, %v994
    %v996 = vpop.f32.mrb[0].mxu0
    %997 = vmatprep.mubr.f32.mxu0 0.0
    %998 = vmatmul.mubr.f32.gmra.mrb[0].mxu0 %v450
    %v999 = vpop.f32.mrb[0].mxu0
    %v1000 = vadd.f32 0.0, %v999
    %v1001 = vpop.f32.mrb[0].mxu0
    %1002 = vmatprep.mubr.f32.mxu0 0.0
    %1003 = vmatmul.mubr.f32.gmra.mrb[0].mxu0 %v453
    %v1004 = vpop.f32.mrb[0].mxu0
    %v1005 = vadd.f32 0.0, %v1004
    %v1006 = vpop.f32.mrb[0].mxu0
    %1007 = vmatprep.mubr.f32.mxu0 0.0
    %1008 = vmatmul.mubr.f32.gmra.mrb[0].mxu0 %v456
    %v1009 = vpop.f32.mrb[0].mxu0
    %v1010 = vadd.f32 0.0, %v1009
    %v1011 = vpop.f32.mrb[0].mxu0
    %1012 = vmatprep.mubr.f32.mxu0 0.0
    %1013 = vmatmul.mubr.f32.gmra.mrb[0].mxu0 %v459
    %v1014 = vpop.f32.mrb[0].mxu0
    %v1015 = vadd.f32 0.0, %v1014
    %v1016 = vpop.f32.mrb[0].mxu0
    %1017 = vmatprep.mubr.f32.mxu0 0.0
    %1018 = vmatmul.mubr.f32.gmra.mrb[0].mxu0 %v462
    %v1019 = vpop.f32.mrb[0].mxu0
    %v1020 = vadd.f32 0.0, %v1019
    %v1021 = vpop.f32.mrb[0].mxu0
    %1022 = vmatprep.mubr.f32.mxu0 0.0
    %1023 = vmatmul.mubr.f32.gmra.mrb[0].mxu0 %v465
    %v1024 = vpop.f32.mrb[0].mxu0
    %v1025 = vadd.f32 0.0, %v1024
    %v1026 = vpop.f32.mrb[0].mxu0
    %1027 = vmatprep.mubr.f32.mxu0 0.0
    %1028 = vmatmul.mubr.f32.gmra.mrb[0].mxu0 %v468
    %v1029 = vpop.f32.mrb[0].mxu0
    %v1030 = vadd.f32 0.0, %v1029
    %v1031 = vpop.f32.mrb[0].mxu0
    %1032 = vmatprep.mubr.f32.mxu0 0.0
    %1033 = vmatmul.mubr.f32.gmra.mrb[0].mxu0 %v471
    %v1034 = vpop.f32.mrb[0].mxu0
    %v1035 = vadd.f32 0.0, %v1034
    %v1036 = vpop.f32.mrb[0].mxu0
    %1037 = vmatprep.mubr.f32.mxu0 0.0
    %1038 = vmatmul.mubr.f32.gmra.mrb[0].mxu0 %v474
    %v1039 = vpop.f32.mrb[0].mxu0
    %v1040 = vadd.f32 0.0, %v1039
    %v1041 = vpop.f32.mrb[0].mxu0
    %1042 = vmatprep.mubr.f32.mxu0 0.0
    %1043 = vmatmul.mubr.f32.gmra.mrb[0].mxu0 %v477
    %v1044 = vpop.f32.mrb[0].mxu0
    %v1045 = vadd.f32 0.0, %v1044
    %v1046 = vpop.f32.mrb[0].mxu0
    %1047 = vmatprep.mubr.f32.mxu0 0.0
    %1048 = vmatmul.mubr.f32.gmra.mrb[0].mxu0 %v480
    %v1049 = vpop.f32.mrb[0].mxu0
    %v1050 = vadd.f32 0.0, %v1049
    %v1051 = vpop.f32.mrb[0].mxu0
    %1052 = vmatprep.mubr.f32.mxu0 0.0
    %1053 = vmatmul.mubr.f32.gmra.mrb[0].mxu0 %v483
    %v1054 = vpop.f32.mrb[0].mxu0
    %v1055 = vadd.f32 0.0, %v1054
    %v1056 = vpop.f32.mrb[0].mxu0
    %1057 = vmatprep.mubr.f32.mxu0 0.0
    %1058 = vmatmul.mubr.f32.gmra.mrb[0].mxu0 %v486
    %v1059 = vpop.f32.mrb[0].mxu0
    %v1060 = vadd.f32 0.0, %v1059
    %v1061 = vpop.f32.mrb[0].mxu0
    %1062 = vmatprep.mubr.f32.mxu0 0.0
    %1063 = vmatmul.mubr.f32.gmra.mrb[0].mxu0 %v489
    %v1064 = vpop.f32.mrb[0].mxu0
    %v1065 = vadd.f32 0.0, %v1064
    %v1066 = vpop.f32.mrb[0].mxu0
    %1067 = vmatprep.mubr.f32.mxu0 0.0
    %1068 = vmatmul.mubr.f32.gmra.mrb[0].mxu0 %v492
    %v1069 = vpop.f32.mrb[0].mxu0
    %v1070 = vadd.f32 0.0, %v1069
    %v1071 = vpop.f32.mrb[0].mxu0
    %1072 = vmatprep.mubr.f32.mxu0 0.0
    %1073 = vmatmul.mubr.f32.gmra.mrb[0].mxu0 %v495
    %v1074 = vpop.f32.mrb[0].mxu0
    %v1075 = vadd.f32 0.0, %v1074
    %v1076 = vpop.f32.mrb[0].mxu0
    %1077 = vmatprep.mubr.f32.mxu0 0.0
    %1078 = vmatmul.mubr.f32.gmra.mrb[0].mxu0 %v498
    %v1079 = vpop.f32.mrb[0].mxu0
    %v1080 = vadd.f32 0.0, %v1079
    %v1081 = vpop.f32.mrb[0].mxu0
    %1082 = vmatprep.mubr.f32.mxu0 0.0
    %1083 = vmatmul.mubr.f32.gmra.mrb[0].mxu0 %v501
    %v1084 = vpop.f32.mrb[0].mxu0
    %v1085 = vadd.f32 0.0, %v1084
    %v1086 = vpop.f32.mrb[0].mxu0
    %1087 = vmatprep.mubr.f32.mxu0 0.0
    %1088 = vmatmul.mubr.f32.gmra.mrb[0].mxu0 %v504
    %v1089 = vpop.f32.mrb[0].mxu0
    %v1090 = vadd.f32 0.0, %v1089
    %v1091 = vpop.f32.mrb[0].mxu0
    %1092 = vmatprep.mubr.f32.mxu0 0.0
    %1093 = vmatmul.mubr.f32.gmra.mrb[0].mxu0 %v507
    %v1094 = vpop.f32.mrb[0].mxu0
    %v1095 = vadd.f32 0.0, %v1094
    %v1096 = vpop.f32.mrb[0].mxu0
    %1097 = vmatprep.mubr.f32.mxu0 0.0
    %1098 = vmatmul.mubr.f32.gmra.mrb[0].mxu0 %v510
    %v1099 = vpop.f32.mrb[0].mxu0
    %v1100 = vadd.f32 0.0, %v1099
    %v1101 = vpop.f32.mrb[0].mxu0
    %1102 = vmatprep.mubr.f32.mxu0 0.0
    %1103 = vmatmul.mubr.f32.gmra.mrb[0].mxu0 %v513
    %v1104 = vpop.f32.mrb[0].mxu0
    %v1105 = vadd.f32 0.0, %v1104
    %v1106 = vpop.f32.mrb[0].mxu0
    %1107 = vmatprep.mubr.f32.mxu0 0.0
    %1108 = vmatmul.mubr.f32.gmra.mrb[0].mxu0 %v516
    %v1109 = vpop.f32.mrb[0].mxu0
    %v1110 = vadd.f32 0.0, %v1109
    %v1111 = vpop.f32.mrb[0].mxu0
    %1112 = vmatprep.mubr.f32.mxu0 0.0
    %1113 = vmatmul.mubr.f32.gmra.mrb[0].mxu0 %v519
    %v1114 = vpop.f32.mrb[0].mxu0
    %v1115 = vadd.f32 0.0, %v1114
    %v1116 = vpop.f32.mrb[0].mxu0
    %1117 = vmatprep.mubr.f32.mxu0 0.0
    %1118 = vmatmul.mubr.f32.gmra.mrb[0].mxu0 %v522
    %v1119 = vpop.f32.mrb[0].mxu0
    %v1120 = vadd.f32 0.0, %v1119
    %v1121 = vpop.f32.mrb[0].mxu0
    %1122 = vmatprep.mubr.f32.mxu0 0.0
    %1123 = vmatmul.mubr.f32.gmra.mrb[0].mxu0 %v525
    %v1124 = vpop.f32.mrb[0].mxu0
    %v1125 = vadd.f32 0.0, %v1124
    %v1126 = vpop.f32.mrb[0].mxu0
    %1127 = vmatprep.mubr.f32.mxu0 0.0
    %1128 = vmatmul.mubr.f32.gmra.mrb[0].mxu0 %v528
    %v1129 = vpop.f32.mrb[0].mxu0
    %v1130 = vadd.f32 0.0, %v1129
    %v1131 = vpop.f32.mrb[0].mxu0
    %1132 = vmatprep.mubr.f32.mxu0 0.0
    %1133 = vmatmul.mubr.f32.gmra.mrb[0].mxu0 %v531
    %v1134 = vpop.f32.mrb[0].mxu0
    %v1135 = vadd.f32 0.0, %v1134
    %v1136 = vpop.f32.mrb[0].mxu0
    %1137 = vmatprep.mubr.f32.mxu0 0.0
    %1138 = vmatmul.mubr.f32.gmra.mrb[0].mxu0 %v534
    %v1139 = vpop.f32.mrb[0].mxu0
    %v1140 = vadd.f32 0.0, %v1139
    %v1141 = vpop.f32.mrb[0].mxu0
    %1142 = vmatprep.mubr.f32.mxu0 0.0
    %1143 = vmatmul.mubr.f32.gmra.mrb[0].mxu0 %v537
    %v1144 = vpop.f32.mrb[0].mxu0
    %v1145 = vadd.f32 0.0, %v1144
    %v1146 = vpop.f32.mrb[0].mxu0
    %1147 = vmatprep.mubr.f32.mxu0 0.0
    %1148 = vmatmul.mubr.f32.gmra.mrb[0].mxu0 %v540
    %v1149 = vpop.f32.mrb[0].mxu0
    %v1150 = vadd.f32 0.0, %v1149
    %v1151 = vpop.f32.mrb[0].mxu0
    %1152 = vmatprep.mubr.f32.mxu0 0.0
    %1153 = vmatmul.mubr.f32.gmra.mrb[0].mxu0 %v543
    %v1154 = vpop.f32.mrb[0].mxu0
    %v1155 = vadd.f32 0.0, %v1154
    %v1156 = vpop.f32.mrb[0].mxu0
    %1157 = vmatprep.mubr.f32.mxu0 0.0
    %1158 = vmatmul.mubr.f32.gmra.mrb[0].mxu0 %v546
    %v1159 = vpop.f32.mrb[0].mxu0
    %v1160 = vadd.f32 0.0, %v1159
    %v1161 = vpop.f32.mrb[0].mxu0
    %1162 = vmatprep.mubr.f32.mxu0 0.0
    %1163 = vmatmul.mubr.f32.gmra.mrb[0].mxu0 %v549
    %v1164 = vpop.f32.mrb[0].mxu0
    %v1165 = vadd.f32 0.0, %v1164
    %v1166 = vpop.f32.mrb[0].mxu0
    %1167 = vmatprep.mubr.f32.mxu0 0.0
    %1168 = vmatmul.mubr.f32.gmra.mrb[0].mxu0 %v552
    %v1169 = vpop.f32.mrb[0].mxu0
    %v1170 = vadd.f32 0.0, %v1169
    %v1171 = vpop.f32.mrb[0].mxu0
    %1172 = vmatprep.mubr.f32.mxu0 0.0
    %1173 = vmatmul.mubr.f32.gmra.mrb[0].mxu0 %v555
    %v1174 = vpop.f32.mrb[0].mxu0
    %v1175 = vadd.f32 0.0, %v1174
    %v1176 = vpop.f32.mrb[0].mxu0
    %1177 = vmatprep.mubr.f32.mxu0 0.0
    %1178 = vmatmul.mubr.f32.gmra.mrb[0].mxu0 %v558
    %v1179 = vpop.f32.mrb[0].mxu0
    %v1180 = vadd.f32 0.0, %v1179
    %v1181 = vpop.f32.mrb[0].mxu0
    %1182 = vmatprep.mubr.f32.mxu0 0.0
    %1183 = vmatmul.mubr.f32.gmra.mrb[0].mxu0 %v561
    %v1184 = vpop.f32.mrb[0].mxu0
    %v1185 = vadd.f32 0.0, %v1184
    %v1186 = vpop.f32.mrb[0].mxu0
    %1187 = vmatprep.mubr.f32.mxu0 0.0
    %1188 = vmatmul.mubr.f32.gmra.mrb[0].mxu0 %v564
    %v1189 = vpop.f32.mrb[0].mxu0
    %v1190 = vadd.f32 0.0, %v1189
    %v1191 = vpop.f32.mrb[0].mxu0
    %1192 = vmatprep.mubr.f32.mxu0 0.0
    %1193 = vmatmul.mubr.f32.gmra.mrb[0].mxu0 %v567
    %v1194 = vpop.f32.mrb[0].mxu0
    %v1195 = vadd.f32 0.0, %v1194
    %v1196 = vpop.f32.mrb[0].mxu0
    %1197 = vmatprep.mubr.f32.mxu0 0.0
    %1198 = vmatmul.mubr.f32.gmra.mrb[0].mxu0 %v570
    %v1199 = vpop.f32.mrb[0].mxu0
    %v1200 = vadd.f32 0.0, %v1199
    %v1201 = vpop.f32.mrb[0].mxu0
    %1202 = vmatprep.mubr.f32.mxu0 0.0
    %1203 = vmatmul.mubr.f32.gmra.mrb[0].mxu0 %v573
    %v1204 = vpop.f32.mrb[0].mxu0
    %v1205 = vadd.f32 0.0, %v1204
    %v1206 = vpop.f32.mrb[0].mxu0
    %1207 = vmatprep.mubr.f32.mxu0 0.0
    %1208 = vmatmul.mubr.f32.gmra.mrb[0].mxu0 %v576
    %v1209 = vpop.f32.mrb[0].mxu0
    %v1210 = vadd.f32 0.0, %v1209
    %v1211 = vpop.f32.mrb[0].mxu0
    %1212 = vmatprep.mubr.f32.mxu0 0.0
    %1213 = vmatmul.mubr.f32.gmra.mrb[0].mxu0 %v579
    %v1214 = vpop.f32.mrb[0].mxu0
    %v1215 = vadd.f32 0.0, %v1214
    %v1216 = vpop.f32.mrb[0].mxu0
    %1217 = vmatprep.mubr.f32.mxu0 0.0
    %1218 = vmatmul.mubr.f32.gmra.mrb[0].mxu0 %v582
    %v1219 = vpop.f32.mrb[0].mxu0
    %v1220 = vadd.f32 0.0, %v1219
    %v1221 = vpop.f32.mrb[0].mxu0
    %1222 = vmatprep.mubr.f32.mxu0 0.0
    %1223 = vmatmul.mubr.f32.gmra.mrb[0].mxu0 %v585
    %v1224 = vpop.f32.mrb[0].mxu0
    %v1225 = vadd.f32 0.0, %v1224
    %v1226 = vpop.f32.mrb[0].mxu0
    %1227 = vmatprep.mubr.f32.mxu0 0.0
    %1228 = vmatmul.mubr.f32.gmra.mrb[0].mxu0 %v588
    %v1229 = vpop.f32.mrb[0].mxu0
    %v1230 = vadd.f32 0.0, %v1229
    %v1231 = vpop.f32.mrb[0].mxu0
    %1232 = vmatprep.mubr.f32.mxu0 0.0
    %1233 = vmatmul.mubr.f32.gmra.mrb[0].mxu0 %v591
    %v1234 = vpop.f32.mrb[0].mxu0
    %v1235 = vadd.f32 0.0, %v1234
    %v1236 = vpop.f32.mrb[0].mxu0
    %1237 = vmatprep.mubr.f32.mxu0 0.0
    %1238 = vmatmul.mubr.f32.gmra.mrb[0].mxu0 %v594
    %v1239 = vpop.f32.mrb[0].mxu0
    %v1240 = vadd.f32 0.0, %v1239
    %v1241 = vpop.f32.mrb[0].mxu0
    %1242 = vmatprep.mubr.f32.mxu0 0.0
    %1243 = vmatmul.mubr.f32.gmra.mrb[0].mxu0 %v597
    %v1244 = vpop.f32.mrb[0].mxu0
    %v1245 = vadd.f32 0.0, %v1244
    %v1246 = vpop.f32.mrb[0].mxu0
    %1247 = vmatprep.mubr.f32.mxu0 0.0
    %1248 = vmatmul.mubr.f32.gmra.mrb[0].mxu0 %v600
    %v1249 = vpop.f32.mrb[0].mxu0
    %v1250 = vadd.f32 0.0, %v1249
    %v1251 = vpop.f32.mrb[0].mxu0
    %1252 = vmatprep.mubr.f32.mxu0 0.0
    %1253 = vmatmul.mubr.f32.gmra.mrb[0].mxu0 %v603
    %v1254 = vpop.f32.mrb[0].mxu0
    %v1255 = vadd.f32 0.0, %v1254
    %v1256 = vpop.f32.mrb[0].mxu0
    %1257 = vmatprep.mubr.f32.mxu0 0.0
    %1258 = vmatmul.mubr.f32.gmra.mrb[0].mxu0 %v606
    %v1259 = vpop.f32.mrb[0].mxu0
    %v1260 = vadd.f32 0.0, %v1259
    %v1261 = vpop.f32.mrb[0].mxu0
    %1262 = vmatprep.mubr.f32.mxu0 0.0
    %1263 = vmatmul.mubr.f32.gmra.mrb[0].mxu0 %v609
    %v1264 = vpop.f32.mrb[0].mxu0
    %v1265 = vadd.f32 0.0, %v1264
    %v1266 = vpop.f32.mrb[0].mxu0
    %1267 = vmatprep.mubr.f32.mxu0 0.0
    %1268 = vmatmul.mubr.f32.gmra.mrb[0].mxu0 %v612
    %v1269 = vpop.f32.mrb[0].mxu0
    %v1270 = vadd.f32 0.0, %v1269
    %v1271 = vpop.f32.mrb[0].mxu0
    %1272 = vmatprep.mubr.f32.mxu0 0.0
    %1273 = vmatmul.mubr.f32.gmra.mrb[0].mxu0 %v615
    %v1274 = vpop.f32.mrb[0].mxu0
    %v1275 = vadd.f32 0.0, %v1274
    %v1276 = vpop.f32.mrb[0].mxu0
    %1277 = vmatprep.mubr.f32.mxu0 0.0
    %1278 = vmatmul.mubr.f32.gmra.mrb[0].mxu0 %v618
    %v1279 = vpop.f32.mrb[0].mxu0
    %v1280 = vadd.f32 0.0, %v1279
    %v1281 = vpop.f32.mrb[0].mxu0
    %1282 = vmatprep.mubr.f32.mxu0 0.0
    %1283 = vmatmul.mubr.f32.gmra.mrb[0].mxu0 %v621
    %v1284 = vpop.f32.mrb[0].mxu0
    %v1285 = vadd.f32 0.0, %v1284
    %v1286 = vpop.f32.mrb[0].mxu0
    %1287 = vmatprep.mubr.f32.mxu0 0.0
    %1288 = vmatmul.mubr.f32.gmra.mrb[0].mxu0 %v624
    %v1289 = vpop.f32.mrb[0].mxu0
    %v1290 = vadd.f32 0.0, %v1289
    %v1291 = vpop.f32.mrb[0].mxu0
    %1292 = vmatprep.mubr.f32.mxu0 0.0
    %1293 = vmatmul.mubr.f32.gmra.mrb[0].mxu0 %v627
    %v1294 = vpop.f32.mrb[0].mxu0
    %v1295 = vadd.f32 0.0, %v1294
    %v1296 = vpop.f32.mrb[0].mxu0
    %1297 = vmatprep.mubr.f32.mxu0 0.0
    %1298 = vmatmul.mubr.f32.gmra.mrb[0].mxu0 %v630
    %v1299 = vpop.f32.mrb[0].mxu0
    %v1300 = vadd.f32 0.0, %v1299
    %v1301 = vpop.f32.mrb[0].mxu0
    %1302 = vmatprep.mubr.f32.mxu0 0.0
    %1303 = vmatmul.mubr.f32.gmra.mrb[0].mxu0 %v633
    %v1304 = vpop.f32.mrb[0].mxu0
    %v1305 = vadd.f32 0.0, %v1304
    %v1306 = vpop.f32.mrb[0].mxu0
    %1307 = vmatprep.mubr.f32.mxu0 0.0
    %1308 = vmatmul.mubr.f32.gmra.mrb[0].mxu0 %v636
    %v1309 = vpop.f32.mrb[0].mxu0
    %v1310 = vadd.f32 0.0, %v1309
    %v1311 = vpop.f32.mrb[0].mxu0
    %1312 = vmatprep.mubr.f32.mxu0 0.0
    %1313 = vmatmul.mubr.f32.gmra.mrb[0].mxu0 %v639
    %v1314 = vpop.f32.mrb[0].mxu0
    %v1315 = vadd.f32 0.0, %v1314
    %v1316 = vpop.f32.mrb[0].mxu0
    %1317 = vmatprep.mubr.f32.mxu0 0.0
    %1318 = vmatmul.mubr.f32.gmra.mrb[0].mxu0 %v642
    %v1319 = vpop.f32.mrb[0].mxu0
    %v1320 = vadd.f32 0.0, %v1319
    %v1321 = vpop.f32.mrb[0].mxu0
    %1322 = vmatprep.mubr.f32.mxu0 0.0
    %1323 = vmatmul.mubr.f32.gmra.mrb[0].mxu0 %v645
    %v1324 = vpop.f32.mrb[0].mxu0
    %v1325 = vadd.f32 0.0, %v1324
    %v1326 = vpop.f32.mrb[0].mxu0
    %1327 = vmatprep.mubr.f32.mxu0 0.0
    %1328 = vmatmul.mubr.f32.gmra.mrb[0].mxu0 %v648
    %v1329 = vpop.f32.mrb[0].mxu0
    %v1330 = vadd.f32 0.0, %v1329
    %v1331 = vpop.f32.mrb[0].mxu0
    %1332 = vmatprep.mubr.f32.mxu0 0.0
    %1333 = vmatmul.mubr.f32.gmra.mrb[0].mxu0 %v651
    %v1334 = vpop.f32.mrb[0].mxu0
    %v1335 = vadd.f32 0.0, %v1334
    %v1336 = vpop.f32.mrb[0].mxu0
    %1337 = vmatprep.mubr.f32.mxu0 0.0
    %1338 = vmatmul.mubr.f32.gmra.mrb[0].mxu0 %v654
    %v1339 = vpop.f32.mrb[0].mxu0
    %v1340 = vadd.f32 0.0, %v1339
    %v1341 = vpop.f32.mrb[0].mxu0
    %1342 = vmatprep.mubr.f32.mxu0 0.0
    %1343 = vmatmul.mubr.f32.gmra.mrb[0].mxu0 %v657
    %v1344 = vpop.f32.mrb[0].mxu0
    %v1345 = vadd.f32 0.0, %v1344
    %v1346 = vpop.f32.mrb[0].mxu0
    %1347 = vmatprep.mubr.f32.mxu0 0.0
    %1348 = vmatmul.mubr.f32.gmra.mrb[0].mxu0 %v660
    %v1349 = vpop.f32.mrb[0].mxu0
    %v1350 = vadd.f32 0.0, %v1349
    %v1351 = vpop.f32.mrb[0].mxu0
    %1352 = vmatprep.mubr.f32.mxu0 0.0
    %1353 = vmatmul.mubr.f32.gmra.mrb[0].mxu0 %v663
    %v1354 = vpop.f32.mrb[0].mxu0
    %v1355 = vadd.f32 0.0, %v1354
    %v1356 = vpop.f32.mrb[0].mxu0
    %1357 = vmatprep.mubr.f32.mxu0 0.0
    %1358 = vmatmul.mubr.f32.gmra.mrb[0].mxu0 %v666
    %v1359 = vpop.f32.mrb[0].mxu0
    %v1360 = vadd.f32 0.0, %v1359
    %v1361 = vpop.f32.mrb[0].mxu0
    %1362 = vmatprep.mubr.f32.mxu0 0.0
    %1363 = vmatmul.mubr.f32.gmra.mrb[0].mxu0 %v669
    %v1364 = vpop.f32.mrb[0].mxu0
    %v1365 = vadd.f32 0.0, %v1364
    %v1366 = vpop.f32.mrb[0].mxu0
    %1367 = vmatprep.mubr.f32.mxu0 0.0
    %1368 = vmatmul.mubr.f32.gmra.mrb[0].mxu0 %v672
    %v1369 = vpop.f32.mrb[0].mxu0
    %v1370 = vadd.f32 0.0, %v1369
    %v1371 = vpop.f32.mrb[0].mxu0
    %1372 = vmatprep.mubr.f32.mxu0 0.0
    %1373 = vmatmul.mubr.f32.gmra.mrb[0].mxu0 %v675
    %v1374 = vpop.f32.mrb[0].mxu0
    %v1375 = vadd.f32 0.0, %v1374
    %v1376 = vpop.f32.mrb[0].mxu0
    %1377 = vmatprep.mubr.f32.mxu0 0.0
    %1378 = vmatmul.mubr.f32.gmra.mrb[0].mxu0 %v678
    %v1379 = vpop.f32.mrb[0].mxu0
    %v1380 = vadd.f32 0.0, %v1379
    %v1381 = vpop.f32.mrb[0].mxu0
    %1382 = vmatprep.mubr.f32.mxu0 0.0
    %1383 = vmatmul.mubr.f32.gmra.mrb[0].mxu0 %v681
    %v1384 = vpop.f32.mrb[0].mxu0
    %v1385 = vadd.f32 0.0, %v1384
    %v1386 = vpop.f32.mrb[0].mxu0
    %1387 = vdwg.mxu0
    %v1388 = vlaneseq
    %v1389 = vshrl.u32 %v1388, 7
    %v1390 = vsub.s32 0, %v1389
    %v1391 = vrot.slane %v145, %v1390
    %v1392 = vlaneseq
    %v1393 = vshrl.u32 %v1392, 7
    %v1394 = vsub.s32 0, %v1393
    %v1395 = vrot.slane %v159, %v1394
    %v1396 = vlaneseq
    %v1397 = vshrl.u32 %v1396, 7
    %v1398 = vsub.s32 0, %v1397
    %v1399 = vrot.slane %v167, %v1398
    %v1400 = vlaneseq
    %v1401 = vshrl.u32 %v1400, 7
    %v1402 = vsub.s32 0, %v1401
    %v1403 = vrot.slane %v169, %v1402
    %v1404 = vlaneseq
    %v1405 = vshrl.u32 %v1404, 7
    %v1406 = vsub.s32 0, %v1405
    %v1407 = vrot.slane %v152, %v1406
    %v1408 = vlaneseq
    %v1409 = vshrl.u32 %v1408, 7
    %v1410 = vsub.s32 0, %v1409
    %v1411 = vrot.slane %v166, %v1410
    %v1412 = vlaneseq
    %v1413 = vshrl.u32 %v1412, 7
    %v1414 = vsub.s32 0, %v1413
    %v1415 = vrot.slane %v168, %v1414
    %v1416 = vlaneseq
    %v1417 = vshrl.u32 %v1416, 7
    %v1418 = vsub.s32 0, %v1417
    %v1419 = vrot.slane %v170, %v1418
    %v1428 = vadd.f32 %v1391, %v750
    %v1429 = vadd.f32 %v1391, %v755
    %v1430 = vadd.f32 %v1391, %v760
    %v1431 = vadd.f32 %v1391, %v765
    %v1432 = vadd.f32 %v1391, %v770
    %v1433 = vadd.f32 %v1391, %v775
    %v1434 = vadd.f32 %v1391, %v780
    %v1435 = vadd.f32 %v1391, %v785
    %v1436 = vadd.f32 %v1391, %v790
    %v1437 = vadd.f32 %v1391, %v795
    %v1438 = vadd.f32 %v1391, %v800
    %v1439 = vadd.f32 %v1391, %v805
    %v1440 = vadd.f32 %v1391, %v810
    %v1441 = vadd.f32 %v1391, %v815
    %v1442 = vadd.f32 %v1391, %v820
    %v1443 = vadd.f32 %v1391, %v825
    %v1444 = vadd.f32 %v1395, %v830
    %v1445 = vadd.f32 %v1395, %v835
    %v1446 = vadd.f32 %v1395, %v840
    %v1447 = vadd.f32 %v1395, %v845
    %v1448 = vadd.f32 %v1395, %v850
    %v1449 = vadd.f32 %v1395, %v855
    %v1450 = vadd.f32 %v1395, %v860
    %v1451 = vadd.f32 %v1395, %v865
    %v1452 = vadd.f32 %v1395, %v870
    %v1453 = vadd.f32 %v1395, %v875
    %v1454 = vadd.f32 %v1395, %v880
    %v1455 = vadd.f32 %v1395, %v885
    %v1456 = vadd.f32 %v1395, %v890
    %v1457 = vadd.f32 %v1395, %v895
    %v1458 = vadd.f32 %v1395, %v900
    %v1459 = vadd.f32 %v1395, %v905
    %v1460 = vadd.f32 %v1399, %v910
    %v1461 = vadd.f32 %v1399, %v915
    %v1462 = vadd.f32 %v1399, %v920
    %v1463 = vadd.f32 %v1399, %v925
    %v1464 = vadd.f32 %v1399, %v930
    %v1465 = vadd.f32 %v1399, %v935
    %v1466 = vadd.f32 %v1399, %v940
    %v1467 = vadd.f32 %v1399, %v945
    %v1468 = vadd.f32 %v1399, %v950
    %v1469 = vadd.f32 %v1399, %v955
    %v1470 = vadd.f32 %v1399, %v960
    %v1471 = vadd.f32 %v1399, %v965
    %v1472 = vadd.f32 %v1399, %v970
    %v1473 = vadd.f32 %v1399, %v975
    %v1474 = vadd.f32 %v1399, %v980
    %v1475 = vadd.f32 %v1399, %v985
    %v1476 = vadd.f32 %v1403, %v990
    %v1477 = vadd.f32 %v1403, %v995
    %v1478 = vadd.f32 %v1403, %v1000
    %v1479 = vadd.f32 %v1403, %v1005
    %v1480 = vadd.f32 %v1403, %v1010
    %v1481 = vadd.f32 %v1403, %v1015
    %v1482 = vadd.f32 %v1403, %v1020
    %v1483 = vadd.f32 %v1403, %v1025
    %v1484 = vadd.f32 %v1403, %v1030
    %v1485 = vadd.f32 %v1403, %v1035
    %v1486 = vadd.f32 %v1403, %v1040
    %v1487 = vadd.f32 %v1403, %v1045
    %v1488 = vadd.f32 %v1403, %v1050
    %v1489 = vadd.f32 %v1403, %v1055
    %v1490 = vadd.f32 %v1403, %v1060
    %v1491 = vadd.f32 %v1403, %v1065
    %v1492 = vadd.f32 %v1407, %v1070
    %v1493 = vadd.f32 %v1407, %v1075
    %v1494 = vadd.f32 %v1407, %v1080
    %v1495 = vadd.f32 %v1407, %v1085
    %v1496 = vadd.f32 %v1407, %v1090
    %v1497 = vadd.f32 %v1407, %v1095
    %v1498 = vadd.f32 %v1407, %v1100
    %v1499 = vadd.f32 %v1407, %v1105
    %v1500 = vadd.f32 %v1407, %v1110
    %v1501 = vadd.f32 %v1407, %v1115
    %v1502 = vadd.f32 %v1407, %v1120
    %v1503 = vadd.f32 %v1407, %v1125
    %v1504 = vadd.f32 %v1407, %v1130
    %v1505 = vadd.f32 %v1407, %v1135
    %v1506 = vadd.f32 %v1407, %v1140
    %v1507 = vadd.f32 %v1407, %v1145
    %v1508 = vadd.f32 %v1411, %v1150
    %v1509 = vadd.f32 %v1411, %v1155
    %v1510 = vadd.f32 %v1411, %v1160
    %v1511 = vadd.f32 %v1411, %v1165
    %v1512 = vadd.f32 %v1411, %v1170
    %v1513 = vadd.f32 %v1411, %v1175
    %v1514 = vadd.f32 %v1411, %v1180
    %v1515 = vadd.f32 %v1411, %v1185
    %v1516 = vadd.f32 %v1411, %v1190
    %v1517 = vadd.f32 %v1411, %v1195
    %v1518 = vadd.f32 %v1411, %v1200
    %v1519 = vadd.f32 %v1411, %v1205
    %v1520 = vadd.f32 %v1411, %v1210
    %v1521 = vadd.f32 %v1411, %v1215
    %v1522 = vadd.f32 %v1411, %v1220
    %v1523 = vadd.f32 %v1411, %v1225
    %v1524 = vadd.f32 %v1415, %v1230
    %v1525 = vadd.f32 %v1415, %v1235
    %v1526 = vadd.f32 %v1415, %v1240
    %v1527 = vadd.f32 %v1415, %v1245
    %v1528 = vadd.f32 %v1415, %v1250
    %v1529 = vadd.f32 %v1415, %v1255
    %v1530 = vadd.f32 %v1415, %v1260
    %v1531 = vadd.f32 %v1415, %v1265
    %v1532 = vadd.f32 %v1415, %v1270
    %v1533 = vadd.f32 %v1415, %v1275
    %v1534 = vadd.f32 %v1415, %v1280
    %v1535 = vadd.f32 %v1415, %v1285
    %v1536 = vadd.f32 %v1415, %v1290
    %v1537 = vadd.f32 %v1415, %v1295
    %v1538 = vadd.f32 %v1415, %v1300
    %v1539 = vadd.f32 %v1415, %v1305
    %v1540 = vadd.f32 %v1419, %v1310
    %v1541 = vadd.f32 %v1419, %v1315
    %v1542 = vadd.f32 %v1419, %v1320
    %v1543 = vadd.f32 %v1419, %v1325
    %v1544 = vadd.f32 %v1419, %v1330
    %v1545 = vadd.f32 %v1419, %v1335
    %v1546 = vadd.f32 %v1419, %v1340
    %v1547 = vadd.f32 %v1419, %v1345
    %v1548 = vadd.f32 %v1419, %v1350
    %v1549 = vadd.f32 %v1419, %v1355
    %v1550 = vadd.f32 %v1419, %v1360
    %v1551 = vadd.f32 %v1419, %v1365
    %v1552 = vadd.f32 %v1419, %v1370
    %v1553 = vadd.f32 %v1419, %v1375
    %v1554 = vadd.f32 %v1419, %v1380
    %v1555 = vadd.f32 %v1419, %v1385
    %v1556 = vtanh.pop %v1428
    %v1557 = vtanh.pop %v1429
    %v1558 = vtanh.pop %v1430
    %v1559 = vtanh.pop %v1431
    %v1560 = vtanh.pop %v1432
    %v1561 = vtanh.pop %v1433
    %v1562 = vtanh.pop %v1434
    %v1563 = vtanh.pop %v1435
    %v1564 = vtanh.pop %v1436
    %v1565 = vtanh.pop %v1437
    %v1566 = vtanh.pop %v1438
    %v1567 = vtanh.pop %v1439
    %v1568 = vtanh.pop %v1440
    %v1569 = vtanh.pop %v1441
    %v1570 = vtanh.pop %v1442
    %v1571 = vtanh.pop %v1443
    %v1572 = vtanh.pop %v1444
    %v1573 = vtanh.pop %v1445
    %v1574 = vtanh.pop %v1446
    %v1575 = vtanh.pop %v1447
    %v1576 = vtanh.pop %v1448
    %v1577 = vtanh.pop %v1449
    %v1578 = vtanh.pop %v1450
    %v1579 = vtanh.pop %v1451
    %v1580 = vtanh.pop %v1452
    %v1581 = vtanh.pop %v1453
    %v1582 = vtanh.pop %v1454
    %v1583 = vtanh.pop %v1455
    %v1584 = vtanh.pop %v1456
    %v1585 = vtanh.pop %v1457
    %v1586 = vtanh.pop %v1458
    %v1587 = vtanh.pop %v1459
    %v1588 = vtanh.pop %v1460
    %v1589 = vtanh.pop %v1461
    %v1590 = vtanh.pop %v1462
    %v1591 = vtanh.pop %v1463
    %v1592 = vtanh.pop %v1464
    %v1593 = vtanh.pop %v1465
    %v1594 = vtanh.pop %v1466
    %v1595 = vtanh.pop %v1467
    %v1596 = vtanh.pop %v1468
    %v1597 = vtanh.pop %v1469
    %v1598 = vtanh.pop %v1470
    %v1599 = vtanh.pop %v1471
    %v1600 = vtanh.pop %v1472
    %v1601 = vtanh.pop %v1473
    %v1602 = vtanh.pop %v1474
    %v1603 = vtanh.pop %v1475
    %v1604 = vtanh.pop %v1476
    %v1605 = vtanh.pop %v1477
    %v1606 = vtanh.pop %v1478
    %v1607 = vtanh.pop %v1479
    %v1608 = vtanh.pop %v1480
    %v1609 = vtanh.pop %v1481
    %v1610 = vtanh.pop %v1482
    %v1611 = vtanh.pop %v1483
    %v1612 = vtanh.pop %v1484
    %v1613 = vtanh.pop %v1485
    %v1614 = vtanh.pop %v1486
    %v1615 = vtanh.pop %v1487
    %v1616 = vtanh.pop %v1488
    %v1617 = vtanh.pop %v1489
    %v1618 = vtanh.pop %v1490
    %v1619 = vtanh.pop %v1491
    %v1620 = vtanh.pop %v1492
    %v1621 = vtanh.pop %v1493
    %v1622 = vtanh.pop %v1494
    %v1623 = vtanh.pop %v1495
    %v1624 = vtanh.pop %v1496
    %v1625 = vtanh.pop %v1497
    %v1626 = vtanh.pop %v1498
    %v1627 = vtanh.pop %v1499
    %v1628 = vtanh.pop %v1500
    %v1629 = vtanh.pop %v1501
    %v1630 = vtanh.pop %v1502
    %v1631 = vtanh.pop %v1503
    %v1632 = vtanh.pop %v1504
    %v1633 = vtanh.pop %v1505
    %v1634 = vtanh.pop %v1506
    %v1635 = vtanh.pop %v1507
    %v1636 = vtanh.pop %v1508
    %v1637 = vtanh.pop %v1509
    %v1638 = vtanh.pop %v1510
    %v1639 = vtanh.pop %v1511
    %v1640 = vtanh.pop %v1512
    %v1641 = vtanh.pop %v1513
    %v1642 = vtanh.pop %v1514
    %v1643 = vtanh.pop %v1515
    %v1644 = vtanh.pop %v1516
    %v1645 = vtanh.pop %v1517
    %v1646 = vtanh.pop %v1518
    %v1647 = vtanh.pop %v1519
    %v1648 = vtanh.pop %v1520
    %v1649 = vtanh.pop %v1521
    %v1650 = vtanh.pop %v1522
    %v1651 = vtanh.pop %v1523
    %v1652 = vtanh.pop %v1524
    %v1653 = vtanh.pop %v1525
    %v1654 = vtanh.pop %v1526
    %v1655 = vtanh.pop %v1527
    %v1656 = vtanh.pop %v1528
    %v1657 = vtanh.pop %v1529
    %v1658 = vtanh.pop %v1530
    %v1659 = vtanh.pop %v1531
    %v1660 = vtanh.pop %v1532
    %v1661 = vtanh.pop %v1533
    %v1662 = vtanh.pop %v1534
    %v1663 = vtanh.pop %v1535
    %v1664 = vtanh.pop %v1536
    %v1665 = vtanh.pop %v1537
    %v1666 = vtanh.pop %v1538
    %v1667 = vtanh.pop %v1539
    %v1668 = vtanh.pop %v1540
    %v1669 = vtanh.pop %v1541
    %v1670 = vtanh.pop %v1542
    %v1671 = vtanh.pop %v1543
    %v1672 = vtanh.pop %v1544
    %v1673 = vtanh.pop %v1545
    %v1674 = vtanh.pop %v1546
    %v1675 = vtanh.pop %v1547
    %v1676 = vtanh.pop %v1548
    %v1677 = vtanh.pop %v1549
    %v1678 = vtanh.pop %v1550
    %v1679 = vtanh.pop %v1551
    %v1680 = vtanh.pop %v1552
    %v1681 = vtanh.pop %v1553
    %v1682 = vtanh.pop %v1554
    %v1683 = vtanh.pop %v1555
    %v1685 = vlaneseq
    %v1686 = vshrl.u32 %v1685, 7
    %v1687 = vsub.s32 0, %v1686
    %v1688 = vrot.slane %v40, %v1687
    %v1690 = vmul.f32 %v1556, %v1688
    %v1691 = vmul.f32 %v1557, %v1688
    %v1692 = vmul.f32 %v1558, %v1688
    %v1693 = vmul.f32 %v1559, %v1688
    %v1694 = vmul.f32 %v1560, %v1688
    %v1695 = vmul.f32 %v1561, %v1688
    %v1696 = vmul.f32 %v1562, %v1688
    %v1697 = vmul.f32 %v1563, %v1688
    %v1698 = vmul.f32 %v1564, %v1688
    %v1699 = vmul.f32 %v1565, %v1688
    %v1700 = vmul.f32 %v1566, %v1688
    %v1701 = vmul.f32 %v1567, %v1688
    %v1702 = vmul.f32 %v1568, %v1688
    %v1703 = vmul.f32 %v1569, %v1688
    %v1704 = vmul.f32 %v1570, %v1688
    %v1705 = vmul.f32 %v1571, %v1688
    %v1706 = vmul.f32 %v1572, %v1688
    %v1707 = vmul.f32 %v1573, %v1688
    %v1708 = vmul.f32 %v1574, %v1688
    %v1709 = vmul.f32 %v1575, %v1688
    %v1710 = vmul.f32 %v1576, %v1688
    %v1711 = vmul.f32 %v1577, %v1688
    %v1712 = vmul.f32 %v1578, %v1688
    %v1713 = vmul.f32 %v1579, %v1688
    %v1714 = vmul.f32 %v1580, %v1688
    %v1715 = vmul.f32 %v1581, %v1688
    %v1716 = vmul.f32 %v1582, %v1688
    %v1717 = vmul.f32 %v1583, %v1688
    %v1718 = vmul.f32 %v1584, %v1688
    %v1719 = vmul.f32 %v1585, %v1688
    %v1720 = vmul.f32 %v1586, %v1688
    %v1721 = vmul.f32 %v1587, %v1688
    %v1722 = vmul.f32 %v1588, %v1688
    %v1723 = vmul.f32 %v1589, %v1688
    %v1724 = vmul.f32 %v1590, %v1688
    %v1725 = vmul.f32 %v1591, %v1688
    %v1726 = vmul.f32 %v1592, %v1688
    %v1727 = vmul.f32 %v1593, %v1688
    %v1728 = vmul.f32 %v1594, %v1688
    %v1729 = vmul.f32 %v1595, %v1688
    %v1730 = vmul.f32 %v1596, %v1688
    %v1731 = vmul.f32 %v1597, %v1688
    %v1732 = vmul.f32 %v1598, %v1688
    %v1733 = vmul.f32 %v1599, %v1688
    %v1734 = vmul.f32 %v1600, %v1688
    %v1735 = vmul.f32 %v1601, %v1688
    %v1736 = vmul.f32 %v1602, %v1688
    %v1737 = vmul.f32 %v1603, %v1688
    %v1738 = vmul.f32 %v1604, %v1688
    %v1739 = vmul.f32 %v1605, %v1688
    %v1740 = vmul.f32 %v1606, %v1688
    %v1741 = vmul.f32 %v1607, %v1688
    %v1742 = vmul.f32 %v1608, %v1688
    %v1743 = vmul.f32 %v1609, %v1688
    %v1744 = vmul.f32 %v1610, %v1688
    %v1745 = vmul.f32 %v1611, %v1688
    %v1746 = vmul.f32 %v1612, %v1688
    %v1747 = vmul.f32 %v1613, %v1688
    %v1748 = vmul.f32 %v1614, %v1688
    %v1749 = vmul.f32 %v1615, %v1688
    %v1750 = vmul.f32 %v1616, %v1688
    %v1751 = vmul.f32 %v1617, %v1688
    %v1752 = vmul.f32 %v1618, %v1688
    %v1753 = vmul.f32 %v1619, %v1688
    %v1754 = vmul.f32 %v1620, %v1688
    %v1755 = vmul.f32 %v1621, %v1688
    %v1756 = vmul.f32 %v1622, %v1688
    %v1757 = vmul.f32 %v1623, %v1688
    %v1758 = vmul.f32 %v1624, %v1688
    %v1759 = vmul.f32 %v1625, %v1688
    %v1760 = vmul.f32 %v1626, %v1688
    %v1761 = vmul.f32 %v1627, %v1688
    %v1762 = vmul.f32 %v1628, %v1688
    %v1763 = vmul.f32 %v1629, %v1688
    %v1764 = vmul.f32 %v1630, %v1688
    %v1765 = vmul.f32 %v1631, %v1688
    %v1766 = vmul.f32 %v1632, %v1688
    %v1767 = vmul.f32 %v1633, %v1688
    %v1768 = vmul.f32 %v1634, %v1688
    %v1769 = vmul.f32 %v1635, %v1688
    %v1770 = vmul.f32 %v1636, %v1688
    %v1771 = vmul.f32 %v1637, %v1688
    %v1772 = vmul.f32 %v1638, %v1688
    %v1773 = vmul.f32 %v1639, %v1688
    %v1774 = vmul.f32 %v1640, %v1688
    %v1775 = vmul.f32 %v1641, %v1688
    %v1776 = vmul.f32 %v1642, %v1688
    %v1777 = vmul.f32 %v1643, %v1688
    %v1778 = vmul.f32 %v1644, %v1688
    %v1779 = vmul.f32 %v1645, %v1688
    %v1780 = vmul.f32 %v1646, %v1688
    %v1781 = vmul.f32 %v1647, %v1688
    %v1782 = vmul.f32 %v1648, %v1688
    %v1783 = vmul.f32 %v1649, %v1688
    %v1784 = vmul.f32 %v1650, %v1688
    %v1785 = vmul.f32 %v1651, %v1688
    %v1786 = vmul.f32 %v1652, %v1688
    %v1787 = vmul.f32 %v1653, %v1688
    %v1788 = vmul.f32 %v1654, %v1688
    %v1789 = vmul.f32 %v1655, %v1688
    %v1790 = vmul.f32 %v1656, %v1688
    %v1791 = vmul.f32 %v1657, %v1688
    %v1792 = vmul.f32 %v1658, %v1688
    %v1793 = vmul.f32 %v1659, %v1688
    %v1794 = vmul.f32 %v1660, %v1688
    %v1795 = vmul.f32 %v1661, %v1688
    %v1796 = vmul.f32 %v1662, %v1688
    %v1797 = vmul.f32 %v1663, %v1688
    %v1798 = vmul.f32 %v1664, %v1688
    %v1799 = vmul.f32 %v1665, %v1688
    %v1800 = vmul.f32 %v1666, %v1688
    %v1801 = vmul.f32 %v1667, %v1688
    %v1802 = vmul.f32 %v1668, %v1688
    %v1803 = vmul.f32 %v1669, %v1688
    %v1804 = vmul.f32 %v1670, %v1688
    %v1805 = vmul.f32 %v1671, %v1688
    %v1806 = vmul.f32 %v1672, %v1688
    %v1807 = vmul.f32 %v1673, %v1688
    %v1808 = vmul.f32 %v1674, %v1688
    %v1809 = vmul.f32 %v1675, %v1688
    %v1810 = vmul.f32 %v1676, %v1688
    %v1811 = vmul.f32 %v1677, %v1688
    %v1812 = vmul.f32 %v1678, %v1688
    %v1813 = vmul.f32 %v1679, %v1688
    %v1814 = vmul.f32 %v1680, %v1688
    %v1815 = vmul.f32 %v1681, %v1688
    %v1816 = vmul.f32 %v1682, %v1688
    %v1817 = vmul.f32 %v1683, %v1688
    %1818 = vadd.xlane.f32.xlu0 %v1690
    %v1819 = vpop.xlane.xlu0 %1818
    %1820 = vadd.xlane.f32.xlu0 %v1691
    %v1821 = vpop.xlane.xlu0 %1820
    %1822 = vadd.xlane.f32.xlu0 %v1692
    %v1823 = vpop.xlane.xlu0 %1822
    %1824 = vadd.xlane.f32.xlu0 %v1693
    %v1825 = vpop.xlane.xlu0 %1824
    %1826 = vadd.xlane.f32.xlu0 %v1694
    %v1827 = vpop.xlane.xlu0 %1826
    %1828 = vadd.xlane.f32.xlu0 %v1695
    %v1829 = vpop.xlane.xlu0 %1828
    %1830 = vadd.xlane.f32.xlu0 %v1696
    %v1831 = vpop.xlane.xlu0 %1830
    %1832 = vadd.xlane.f32.xlu0 %v1697
    %v1833 = vpop.xlane.xlu0 %1832
    %1834 = vadd.xlane.f32.xlu0 %v1698
    %v1835 = vpop.xlane.xlu0 %1834
    %1836 = vadd.xlane.f32.xlu0 %v1699
    %v1837 = vpop.xlane.xlu0 %1836
    %1838 = vadd.xlane.f32.xlu0 %v1700
    %v1839 = vpop.xlane.xlu0 %1838
    %1840 = vadd.xlane.f32.xlu0 %v1701
    %v1841 = vpop.xlane.xlu0 %1840
    %1842 = vadd.xlane.f32.xlu0 %v1702
    %v1843 = vpop.xlane.xlu0 %1842
    %1844 = vadd.xlane.f32.xlu0 %v1703
    %v1845 = vpop.xlane.xlu0 %1844
    %1846 = vadd.xlane.f32.xlu0 %v1704
    %v1847 = vpop.xlane.xlu0 %1846
    %1848 = vadd.xlane.f32.xlu0 %v1705
    %v1849 = vpop.xlane.xlu0 %1848
    %1850 = vadd.xlane.f32.xlu0 %v1706
    %v1851 = vpop.xlane.xlu0 %1850
    %1852 = vadd.xlane.f32.xlu0 %v1707
    %v1853 = vpop.xlane.xlu0 %1852
    %1854 = vadd.xlane.f32.xlu0 %v1708
    %v1855 = vpop.xlane.xlu0 %1854
    %1856 = vadd.xlane.f32.xlu0 %v1709
    %v1857 = vpop.xlane.xlu0 %1856
    %1858 = vadd.xlane.f32.xlu0 %v1710
    %v1859 = vpop.xlane.xlu0 %1858
    %1860 = vadd.xlane.f32.xlu0 %v1711
    %v1861 = vpop.xlane.xlu0 %1860
    %1862 = vadd.xlane.f32.xlu0 %v1712
    %v1863 = vpop.xlane.xlu0 %1862
    %1864 = vadd.xlane.f32.xlu0 %v1713
    %v1865 = vpop.xlane.xlu0 %1864
    %1866 = vadd.xlane.f32.xlu0 %v1714
    %v1867 = vpop.xlane.xlu0 %1866
    %1868 = vadd.xlane.f32.xlu0 %v1715
    %v1869 = vpop.xlane.xlu0 %1868
    %1870 = vadd.xlane.f32.xlu0 %v1716
    %v1871 = vpop.xlane.xlu0 %1870
    %1872 = vadd.xlane.f32.xlu0 %v1717
    %v1873 = vpop.xlane.xlu0 %1872
    %1874 = vadd.xlane.f32.xlu0 %v1718
    %v1875 = vpop.xlane.xlu0 %1874
    %1876 = vadd.xlane.f32.xlu0 %v1719
    %v1877 = vpop.xlane.xlu0 %1876
    %1878 = vadd.xlane.f32.xlu0 %v1720
    %v1879 = vpop.xlane.xlu0 %1878
    %1880 = vadd.xlane.f32.xlu0 %v1721
    %v1881 = vpop.xlane.xlu0 %1880
    %1882 = vadd.xlane.f32.xlu0 %v1722
    %v1883 = vpop.xlane.xlu0 %1882
    %1884 = vadd.xlane.f32.xlu0 %v1723
    %v1885 = vpop.xlane.xlu0 %1884
    %1886 = vadd.xlane.f32.xlu0 %v1724
    %v1887 = vpop.xlane.xlu0 %1886
    %1888 = vadd.xlane.f32.xlu0 %v1725
    %v1889 = vpop.xlane.xlu0 %1888
    %1890 = vadd.xlane.f32.xlu0 %v1726
    %v1891 = vpop.xlane.xlu0 %1890
    %1892 = vadd.xlane.f32.xlu0 %v1727
    %v1893 = vpop.xlane.xlu0 %1892
    %1894 = vadd.xlane.f32.xlu0 %v1728
    %v1895 = vpop.xlane.xlu0 %1894
    %1896 = vadd.xlane.f32.xlu0 %v1729
    %v1897 = vpop.xlane.xlu0 %1896
    %1898 = vadd.xlane.f32.xlu0 %v1730
    %v1899 = vpop.xlane.xlu0 %1898
    %1900 = vadd.xlane.f32.xlu0 %v1731
    %v1901 = vpop.xlane.xlu0 %1900
    %1902 = vadd.xlane.f32.xlu0 %v1732
    %v1903 = vpop.xlane.xlu0 %1902
    %1904 = vadd.xlane.f32.xlu0 %v1733
    %v1905 = vpop.xlane.xlu0 %1904
    %1906 = vadd.xlane.f32.xlu0 %v1734
    %v1907 = vpop.xlane.xlu0 %1906
    %1908 = vadd.xlane.f32.xlu0 %v1735
    %v1909 = vpop.xlane.xlu0 %1908
    %1910 = vadd.xlane.f32.xlu0 %v1736
    %v1911 = vpop.xlane.xlu0 %1910
    %1912 = vadd.xlane.f32.xlu0 %v1737
    %v1913 = vpop.xlane.xlu0 %1912
    %1914 = vadd.xlane.f32.xlu0 %v1738
    %v1915 = vpop.xlane.xlu0 %1914
    %1916 = vadd.xlane.f32.xlu0 %v1739
    %v1917 = vpop.xlane.xlu0 %1916
    %1918 = vadd.xlane.f32.xlu0 %v1740
    %v1919 = vpop.xlane.xlu0 %1918
    %1920 = vadd.xlane.f32.xlu0 %v1741
    %v1921 = vpop.xlane.xlu0 %1920
    %1922 = vadd.xlane.f32.xlu0 %v1742
    %v1923 = vpop.xlane.xlu0 %1922
    %1924 = vadd.xlane.f32.xlu0 %v1743
    %v1925 = vpop.xlane.xlu0 %1924
    %1926 = vadd.xlane.f32.xlu0 %v1744
    %v1927 = vpop.xlane.xlu0 %1926
    %1928 = vadd.xlane.f32.xlu0 %v1745
    %v1929 = vpop.xlane.xlu0 %1928
    %1930 = vadd.xlane.f32.xlu0 %v1746
    %v1931 = vpop.xlane.xlu0 %1930
    %1932 = vadd.xlane.f32.xlu0 %v1747
    %v1933 = vpop.xlane.xlu0 %1932
    %1934 = vadd.xlane.f32.xlu0 %v1748
    %v1935 = vpop.xlane.xlu0 %1934
    %1936 = vadd.xlane.f32.xlu0 %v1749
    %v1937 = vpop.xlane.xlu0 %1936
    %1938 = vadd.xlane.f32.xlu0 %v1750
    %v1939 = vpop.xlane.xlu0 %1938
    %1940 = vadd.xlane.f32.xlu0 %v1751
    %v1941 = vpop.xlane.xlu0 %1940
    %1942 = vadd.xlane.f32.xlu0 %v1752
    %v1943 = vpop.xlane.xlu0 %1942
    %1944 = vadd.xlane.f32.xlu0 %v1753
    %v1945 = vpop.xlane.xlu0 %1944
    %1946 = vadd.xlane.f32.xlu0 %v1754
    %v1947 = vpop.xlane.xlu0 %1946
    %1948 = vadd.xlane.f32.xlu0 %v1755
    %v1949 = vpop.xlane.xlu0 %1948
    %1950 = vadd.xlane.f32.xlu0 %v1756
    %v1951 = vpop.xlane.xlu0 %1950
    %1952 = vadd.xlane.f32.xlu0 %v1757
    %v1953 = vpop.xlane.xlu0 %1952
    %1954 = vadd.xlane.f32.xlu0 %v1758
    %v1955 = vpop.xlane.xlu0 %1954
    %1956 = vadd.xlane.f32.xlu0 %v1759
    %v1957 = vpop.xlane.xlu0 %1956
    %1958 = vadd.xlane.f32.xlu0 %v1760
    %v1959 = vpop.xlane.xlu0 %1958
    %1960 = vadd.xlane.f32.xlu0 %v1761
    %v1961 = vpop.xlane.xlu0 %1960
    %1962 = vadd.xlane.f32.xlu0 %v1762
    %v1963 = vpop.xlane.xlu0 %1962
    %1964 = vadd.xlane.f32.xlu0 %v1763
    %v1965 = vpop.xlane.xlu0 %1964
    %1966 = vadd.xlane.f32.xlu0 %v1764
    %v1967 = vpop.xlane.xlu0 %1966
    %1968 = vadd.xlane.f32.xlu0 %v1765
    %v1969 = vpop.xlane.xlu0 %1968
    %1970 = vadd.xlane.f32.xlu0 %v1766
    %v1971 = vpop.xlane.xlu0 %1970
    %1972 = vadd.xlane.f32.xlu0 %v1767
    %v1973 = vpop.xlane.xlu0 %1972
    %1974 = vadd.xlane.f32.xlu0 %v1768
    %v1975 = vpop.xlane.xlu0 %1974
    %1976 = vadd.xlane.f32.xlu0 %v1769
    %v1977 = vpop.xlane.xlu0 %1976
    %1978 = vadd.xlane.f32.xlu0 %v1770
    %v1979 = vpop.xlane.xlu0 %1978
    %1980 = vadd.xlane.f32.xlu0 %v1771
    %v1981 = vpop.xlane.xlu0 %1980
    %1982 = vadd.xlane.f32.xlu0 %v1772
    %v1983 = vpop.xlane.xlu0 %1982
    %1984 = vadd.xlane.f32.xlu0 %v1773
    %v1985 = vpop.xlane.xlu0 %1984
    %1986 = vadd.xlane.f32.xlu0 %v1774
    %v1987 = vpop.xlane.xlu0 %1986
    %1988 = vadd.xlane.f32.xlu0 %v1775
    %v1989 = vpop.xlane.xlu0 %1988
    %1990 = vadd.xlane.f32.xlu0 %v1776
    %v1991 = vpop.xlane.xlu0 %1990
    %1992 = vadd.xlane.f32.xlu0 %v1777
    %v1993 = vpop.xlane.xlu0 %1992
    %1994 = vadd.xlane.f32.xlu0 %v1778
    %v1995 = vpop.xlane.xlu0 %1994
    %1996 = vadd.xlane.f32.xlu0 %v1779
    %v1997 = vpop.xlane.xlu0 %1996
    %1998 = vadd.xlane.f32.xlu0 %v1780
    %v1999 = vpop.xlane.xlu0 %1998
    %2000 = vadd.xlane.f32.xlu0 %v1781
    %v2001 = vpop.xlane.xlu0 %2000
    %2002 = vadd.xlane.f32.xlu0 %v1782
    %v2003 = vpop.xlane.xlu0 %2002
    %2004 = vadd.xlane.f32.xlu0 %v1783
    %v2005 = vpop.xlane.xlu0 %2004
    %2006 = vadd.xlane.f32.xlu0 %v1784
    %v2007 = vpop.xlane.xlu0 %2006
    %2008 = vadd.xlane.f32.xlu0 %v1785
    %v2009 = vpop.xlane.xlu0 %2008
    %2010 = vadd.xlane.f32.xlu0 %v1786
    %v2011 = vpop.xlane.xlu0 %2010
    %2012 = vadd.xlane.f32.xlu0 %v1787
    %v2013 = vpop.xlane.xlu0 %2012
    %2014 = vadd.xlane.f32.xlu0 %v1788
    %v2015 = vpop.xlane.xlu0 %2014
    %2016 = vadd.xlane.f32.xlu0 %v1789
    %v2017 = vpop.xlane.xlu0 %2016
    %2018 = vadd.xlane.f32.xlu0 %v1790
    %v2019 = vpop.xlane.xlu0 %2018
    %2020 = vadd.xlane.f32.xlu0 %v1791
    %v2021 = vpop.xlane.xlu0 %2020
    %2022 = vadd.xlane.f32.xlu0 %v1792
    %v2023 = vpop.xlane.xlu0 %2022
    %2024 = vadd.xlane.f32.xlu0 %v1793
    %v2025 = vpop.xlane.xlu0 %2024
    %2026 = vadd.xlane.f32.xlu0 %v1794
    %v2027 = vpop.xlane.xlu0 %2026
    %2028 = vadd.xlane.f32.xlu0 %v1795
    %v2029 = vpop.xlane.xlu0 %2028
    %2030 = vadd.xlane.f32.xlu0 %v1796
    %v2031 = vpop.xlane.xlu0 %2030
    %2032 = vadd.xlane.f32.xlu0 %v1797
    %v2033 = vpop.xlane.xlu0 %2032
    %2034 = vadd.xlane.f32.xlu0 %v1798
    %v2035 = vpop.xlane.xlu0 %2034
    %2036 = vadd.xlane.f32.xlu0 %v1799
    %v2037 = vpop.xlane.xlu0 %2036
    %2038 = vadd.xlane.f32.xlu0 %v1800
    %v2039 = vpop.xlane.xlu0 %2038
    %2040 = vadd.xlane.f32.xlu0 %v1801
    %v2041 = vpop.xlane.xlu0 %2040
    %2042 = vadd.xlane.f32.xlu0 %v1802
    %v2043 = vpop.xlane.xlu0 %2042
    %2044 = vadd.xlane.f32.xlu0 %v1803
    %v2045 = vpop.xlane.xlu0 %2044
    %2046 = vadd.xlane.f32.xlu0 %v1804
    %v2047 = vpop.xlane.xlu0 %2046
    %2048 = vadd.xlane.f32.xlu0 %v1805
    %v2049 = vpop.xlane.xlu0 %2048
    %2050 = vadd.xlane.f32.xlu0 %v1806
    %v2051 = vpop.xlane.xlu0 %2050
    %2052 = vadd.xlane.f32.xlu0 %v1807
    %v2053 = vpop.xlane.xlu0 %2052
    %2054 = vadd.xlane.f32.xlu0 %v1808
    %v2055 = vpop.xlane.xlu0 %2054
    %2056 = vadd.xlane.f32.xlu0 %v1809
    %v2057 = vpop.xlane.xlu0 %2056
    %2058 = vadd.xlane.f32.xlu0 %v1810
    %v2059 = vpop.xlane.xlu0 %2058
    %2060 = vadd.xlane.f32.xlu0 %v1811
    %v2061 = vpop.xlane.xlu0 %2060
    %2062 = vadd.xlane.f32.xlu0 %v1812
    %v2063 = vpop.xlane.xlu0 %2062
    %2064 = vadd.xlane.f32.xlu0 %v1813
    %v2065 = vpop.xlane.xlu0 %2064
    %2066 = vadd.xlane.f32.xlu0 %v1814
    %v2067 = vpop.xlane.xlu0 %2066
    %2068 = vadd.xlane.f32.xlu0 %v1815
    %v2069 = vpop.xlane.xlu0 %2068
    %2070 = vadd.xlane.f32.xlu0 %v1816
    %v2071 = vpop.xlane.xlu0 %2070
    %2072 = vadd.xlane.f32.xlu0 %v1817
    %v2073 = vpop.xlane.xlu0 %2072
    %v2202 = vlaneseq
    %v2203 = vand.u32 %v2202, 127
    %v2204 = vlaneseq
    %v2205 = vshrl.u32 %v2204, 7
    %v2206 = vsub.s32 %v2203, %v2205
    %v2207 = vrot.slane %v1819, %v2206
    %v2208 = vadd.s32 %v2203, 4294967288
    %v2209 = vlaneseq
    %v2210 = vshrl.u32 %v2209, 7
    %v2211 = vsub.s32 %v2208, %v2210
    %v2212 = vrot.slane %v1821, %v2211
    %vm2213 = vcmask 130112
    %v2214 = vsel %vm2213, %v2212, %v2207
    %v2215 = vadd.s32 %v2203, 4294967280
    %v2216 = vlaneseq
    %v2217 = vshrl.u32 %v2216, 7
    %v2218 = vsub.s32 %v2215, %v2217
    %v2219 = vrot.slane %v1823, %v2218
    %vm2220 = vcmask 195712
    %v2221 = vsel %vm2220, %v2219, %v2214
    %v2222 = vadd.s32 %v2203, 4294967272
    %v2223 = vlaneseq
    %v2224 = vshrl.u32 %v2223, 7
    %v2225 = vsub.s32 %v2222, %v2224
    %v2226 = vrot.slane %v1825, %v2225
    %vm2227 = vcmask 261312
    %v2228 = vsel %vm2227, %v2226, %v2221
    %v2229 = vadd.s32 %v2203, 4294967264
    %v2230 = vlaneseq
    %v2231 = vshrl.u32 %v2230, 7
    %v2232 = vsub.s32 %v2229, %v2231
    %v2233 = vrot.slane %v1827, %v2232
    %vm2234 = vcmask 326912
    %v2235 = vsel %vm2234, %v2233, %v2228
    %v2236 = vadd.s32 %v2203, 4294967256
    %v2237 = vlaneseq
    %v2238 = vshrl.u32 %v2237, 7
    %v2239 = vsub.s32 %v2236, %v2238
    %v2240 = vrot.slane %v1829, %v2239
    %vm2241 = vcmask 392512
    %v2242 = vsel %vm2241, %v2240, %v2235
    %v2243 = vadd.s32 %v2203, 4294967248
    %v2244 = vlaneseq
    %v2245 = vshrl.u32 %v2244, 7
    %v2246 = vsub.s32 %v2243, %v2245
    %v2247 = vrot.slane %v1831, %v2246
    %vm2248 = vcmask 458112
    %v2249 = vsel %vm2248, %v2247, %v2242
    %v2250 = vadd.s32 %v2203, 4294967240
    %v2251 = vlaneseq
    %v2252 = vshrl.u32 %v2251, 7
    %v2253 = vsub.s32 %v2250, %v2252
    %v2254 = vrot.slane %v1833, %v2253
    %vm2255 = vcmask 523712
    %v2256 = vsel %vm2255, %v2254, %v2249
    %v2257 = vadd.s32 %v2203, 4294967232
    %v2258 = vlaneseq
    %v2259 = vshrl.u32 %v2258, 7
    %v2260 = vsub.s32 %v2257, %v2259
    %v2261 = vrot.slane %v1835, %v2260
    %vm2262 = vcmask 589312
    %v2263 = vsel %vm2262, %v2261, %v2256
    %v2264 = vadd.s32 %v2203, 4294967224
    %v2265 = vlaneseq
    %v2266 = vshrl.u32 %v2265, 7
    %v2267 = vsub.s32 %v2264, %v2266
    %v2268 = vrot.slane %v1837, %v2267
    %vm2269 = vcmask 654912
    %v2270 = vsel %vm2269, %v2268, %v2263
    %v2271 = vadd.s32 %v2203, 4294967216
    %v2272 = vlaneseq
    %v2273 = vshrl.u32 %v2272, 7
    %v2274 = vsub.s32 %v2271, %v2273
    %v2275 = vrot.slane %v1839, %v2274
    %vm2276 = vcmask 720512
    %v2277 = vsel %vm2276, %v2275, %v2270
    %v2278 = vadd.s32 %v2203, 4294967208
    %v2279 = vlaneseq
    %v2280 = vshrl.u32 %v2279, 7
    %v2281 = vsub.s32 %v2278, %v2280
    %v2282 = vrot.slane %v1841, %v2281
    %vm2283 = vcmask 786112
    %v2284 = vsel %vm2283, %v2282, %v2277
    %v2285 = vadd.s32 %v2203, 4294967200
    %v2286 = vlaneseq
    %v2287 = vshrl.u32 %v2286, 7
    %v2288 = vsub.s32 %v2285, %v2287
    %v2289 = vrot.slane %v1843, %v2288
    %vm2290 = vcmask 851712
    %v2291 = vsel %vm2290, %v2289, %v2284
    %v2292 = vadd.s32 %v2203, 4294967192
    %v2293 = vlaneseq
    %v2294 = vshrl.u32 %v2293, 7
    %v2295 = vsub.s32 %v2292, %v2294
    %v2296 = vrot.slane %v1845, %v2295
    %vm2297 = vcmask 917312
    %v2298 = vsel %vm2297, %v2296, %v2291
    %v2299 = vadd.s32 %v2203, 4294967184
    %v2300 = vlaneseq
    %v2301 = vshrl.u32 %v2300, 7
    %v2302 = vsub.s32 %v2299, %v2301
    %v2303 = vrot.slane %v1847, %v2302
    %vm2304 = vcmask 982912
    %v2305 = vsel %vm2304, %v2303, %v2298
    %v2306 = vadd.s32 %v2203, 4294967176
    %v2307 = vlaneseq
    %v2308 = vshrl.u32 %v2307, 7
    %v2309 = vsub.s32 %v2306, %v2308
    %v2310 = vrot.slane %v1849, %v2309
    %vm2311 = vcmask 1048512
    %v2312 = vsel %vm2311, %v2310, %v2305
    %v2313 = vlaneseq
    %v2314 = vshrl.u32 %v2313, 7
    %v2315 = vsub.s32 %v2203, %v2314
    %v2316 = vrot.slane %v1851, %v2315
    %v2317 = vlaneseq
    %v2318 = vshrl.u32 %v2317, 7
    %v2319 = vsub.s32 %v2208, %v2318
    %v2320 = vrot.slane %v1853, %v2319
    %v2321 = vsel %vm2213, %v2320, %v2316
    %v2322 = vlaneseq
    %v2323 = vshrl.u32 %v2322, 7
    %v2324 = vsub.s32 %v2215, %v2323
    %v2325 = vrot.slane %v1855, %v2324
    %v2326 = vsel %vm2220, %v2325, %v2321
    %v2327 = vlaneseq
    %v2328 = vshrl.u32 %v2327, 7
    %v2329 = vsub.s32 %v2222, %v2328
    %v2330 = vrot.slane %v1857, %v2329
    %v2331 = vsel %vm2227, %v2330, %v2326
    %v2332 = vlaneseq
    %v2333 = vshrl.u32 %v2332, 7
    %v2334 = vsub.s32 %v2229, %v2333
    %v2335 = vrot.slane %v1859, %v2334
    %v2336 = vsel %vm2234, %v2335, %v2331
    %v2337 = vlaneseq
    %v2338 = vshrl.u32 %v2337, 7
    %v2339 = vsub.s32 %v2236, %v2338
    %v2340 = vrot.slane %v1861, %v2339
    %v2341 = vsel %vm2241, %v2340, %v2336
    %v2342 = vlaneseq
    %v2343 = vshrl.u32 %v2342, 7
    %v2344 = vsub.s32 %v2243, %v2343
    %v2345 = vrot.slane %v1863, %v2344
    %v2346 = vsel %vm2248, %v2345, %v2341
    %v2347 = vlaneseq
    %v2348 = vshrl.u32 %v2347, 7
    %v2349 = vsub.s32 %v2250, %v2348
    %v2350 = vrot.slane %v1865, %v2349
    %v2351 = vsel %vm2255, %v2350, %v2346
    %v2352 = vlaneseq
    %v2353 = vshrl.u32 %v2352, 7
    %v2354 = vsub.s32 %v2257, %v2353
    %v2355 = vrot.slane %v1867, %v2354
    %v2356 = vsel %vm2262, %v2355, %v2351
    %v2357 = vlaneseq
    %v2358 = vshrl.u32 %v2357, 7
    %v2359 = vsub.s32 %v2264, %v2358
    %v2360 = vrot.slane %v1869, %v2359
    %v2361 = vsel %vm2269, %v2360, %v2356
    %v2362 = vlaneseq
    %v2363 = vshrl.u32 %v2362, 7
    %v2364 = vsub.s32 %v2271, %v2363
    %v2365 = vrot.slane %v1871, %v2364
    %v2366 = vsel %vm2276, %v2365, %v2361
    %v2367 = vlaneseq
    %v2368 = vshrl.u32 %v2367, 7
    %v2369 = vsub.s32 %v2278, %v2368
    %v2370 = vrot.slane %v1873, %v2369
    %v2371 = vsel %vm2283, %v2370, %v2366
    %v2372 = vlaneseq
    %v2373 = vshrl.u32 %v2372, 7
    %v2374 = vsub.s32 %v2285, %v2373
    %v2375 = vrot.slane %v1875, %v2374
    %v2376 = vsel %vm2290, %v2375, %v2371
    %v2377 = vlaneseq
    %v2378 = vshrl.u32 %v2377, 7
    %v2379 = vsub.s32 %v2292, %v2378
    %v2380 = vrot.slane %v1877, %v2379
    %v2381 = vsel %vm2297, %v2380, %v2376
    %v2382 = vlaneseq
    %v2383 = vshrl.u32 %v2382, 7
    %v2384 = vsub.s32 %v2299, %v2383
    %v2385 = vrot.slane %v1879, %v2384
    %v2386 = vsel %vm2304, %v2385, %v2381
    %v2387 = vlaneseq
    %v2388 = vshrl.u32 %v2387, 7
    %v2389 = vsub.s32 %v2306, %v2388
    %v2390 = vrot.slane %v1881, %v2389
    %v2391 = vsel %vm2311, %v2390, %v2386
    %v2392 = vlaneseq
    %v2393 = vshrl.u32 %v2392, 7
    %v2394 = vsub.s32 %v2203, %v2393
    %v2395 = vrot.slane %v1883, %v2394
    %v2396 = vlaneseq
    %v2397 = vshrl.u32 %v2396, 7
    %v2398 = vsub.s32 %v2208, %v2397
    %v2399 = vrot.slane %v1885, %v2398
    %v2400 = vsel %vm2213, %v2399, %v2395
    %v2401 = vlaneseq
    %v2402 = vshrl.u32 %v2401, 7
    %v2403 = vsub.s32 %v2215, %v2402
    %v2404 = vrot.slane %v1887, %v2403
    %v2405 = vsel %vm2220, %v2404, %v2400
    %v2406 = vlaneseq
    %v2407 = vshrl.u32 %v2406, 7
    %v2408 = vsub.s32 %v2222, %v2407
    %v2409 = vrot.slane %v1889, %v2408
    %v2410 = vsel %vm2227, %v2409, %v2405
    %v2411 = vlaneseq
    %v2412 = vshrl.u32 %v2411, 7
    %v2413 = vsub.s32 %v2229, %v2412
    %v2414 = vrot.slane %v1891, %v2413
    %v2415 = vsel %vm2234, %v2414, %v2410
    %v2416 = vlaneseq
    %v2417 = vshrl.u32 %v2416, 7
    %v2418 = vsub.s32 %v2236, %v2417
    %v2419 = vrot.slane %v1893, %v2418
    %v2420 = vsel %vm2241, %v2419, %v2415
    %v2421 = vlaneseq
    %v2422 = vshrl.u32 %v2421, 7
    %v2423 = vsub.s32 %v2243, %v2422
    %v2424 = vrot.slane %v1895, %v2423
    %v2425 = vsel %vm2248, %v2424, %v2420
    %v2426 = vlaneseq
    %v2427 = vshrl.u32 %v2426, 7
    %v2428 = vsub.s32 %v2250, %v2427
    %v2429 = vrot.slane %v1897, %v2428
    %v2430 = vsel %vm2255, %v2429, %v2425
    %v2431 = vlaneseq
    %v2432 = vshrl.u32 %v2431, 7
    %v2433 = vsub.s32 %v2257, %v2432
    %v2434 = vrot.slane %v1899, %v2433
    %v2435 = vsel %vm2262, %v2434, %v2430
    %v2436 = vlaneseq
    %v2437 = vshrl.u32 %v2436, 7
    %v2438 = vsub.s32 %v2264, %v2437
    %v2439 = vrot.slane %v1901, %v2438
    %v2440 = vsel %vm2269, %v2439, %v2435
    %v2441 = vlaneseq
    %v2442 = vshrl.u32 %v2441, 7
    %v2443 = vsub.s32 %v2271, %v2442
    %v2444 = vrot.slane %v1903, %v2443
    %v2445 = vsel %vm2276, %v2444, %v2440
    %v2446 = vlaneseq
    %v2447 = vshrl.u32 %v2446, 7
    %v2448 = vsub.s32 %v2278, %v2447
    %v2449 = vrot.slane %v1905, %v2448
    %v2450 = vsel %vm2283, %v2449, %v2445
    %v2451 = vlaneseq
    %v2452 = vshrl.u32 %v2451, 7
    %v2453 = vsub.s32 %v2285, %v2452
    %v2454 = vrot.slane %v1907, %v2453
    %v2455 = vsel %vm2290, %v2454, %v2450
    %v2456 = vlaneseq
    %v2457 = vshrl.u32 %v2456, 7
    %v2458 = vsub.s32 %v2292, %v2457
    %v2459 = vrot.slane %v1909, %v2458
    %v2460 = vsel %vm2297, %v2459, %v2455
    %v2461 = vlaneseq
    %v2462 = vshrl.u32 %v2461, 7
    %v2463 = vsub.s32 %v2299, %v2462
    %v2464 = vrot.slane %v1911, %v2463
    %v2465 = vsel %vm2304, %v2464, %v2460
    %v2466 = vlaneseq
    %v2467 = vshrl.u32 %v2466, 7
    %v2468 = vsub.s32 %v2306, %v2467
    %v2469 = vrot.slane %v1913, %v2468
    %v2470 = vsel %vm2311, %v2469, %v2465
    %v2471 = vlaneseq
    %v2472 = vshrl.u32 %v2471, 7
    %v2473 = vsub.s32 %v2203, %v2472
    %v2474 = vrot.slane %v1915, %v2473
    %v2475 = vlaneseq
    %v2476 = vshrl.u32 %v2475, 7
    %v2477 = vsub.s32 %v2208, %v2476
    %v2478 = vrot.slane %v1917, %v2477
    %v2479 = vsel %vm2213, %v2478, %v2474
    %v2480 = vlaneseq
    %v2481 = vshrl.u32 %v2480, 7
    %v2482 = vsub.s32 %v2215, %v2481
    %v2483 = vrot.slane %v1919, %v2482
    %v2484 = vsel %vm2220, %v2483, %v2479
    %v2485 = vlaneseq
    %v2486 = vshrl.u32 %v2485, 7
    %v2487 = vsub.s32 %v2222, %v2486
    %v2488 = vrot.slane %v1921, %v2487
    %v2489 = vsel %vm2227, %v2488, %v2484
    %v2490 = vlaneseq
    %v2491 = vshrl.u32 %v2490, 7
    %v2492 = vsub.s32 %v2229, %v2491
    %v2493 = vrot.slane %v1923, %v2492
    %v2494 = vsel %vm2234, %v2493, %v2489
    %v2495 = vlaneseq
    %v2496 = vshrl.u32 %v2495, 7
    %v2497 = vsub.s32 %v2236, %v2496
    %v2498 = vrot.slane %v1925, %v2497
    %v2499 = vsel %vm2241, %v2498, %v2494
    %v2500 = vlaneseq
    %v2501 = vshrl.u32 %v2500, 7
    %v2502 = vsub.s32 %v2243, %v2501
    %v2503 = vrot.slane %v1927, %v2502
    %v2504 = vsel %vm2248, %v2503, %v2499
    %v2505 = vlaneseq
    %v2506 = vshrl.u32 %v2505, 7
    %v2507 = vsub.s32 %v2250, %v2506
    %v2508 = vrot.slane %v1929, %v2507
    %v2509 = vsel %vm2255, %v2508, %v2504
    %v2510 = vlaneseq
    %v2511 = vshrl.u32 %v2510, 7
    %v2512 = vsub.s32 %v2257, %v2511
    %v2513 = vrot.slane %v1931, %v2512
    %v2514 = vsel %vm2262, %v2513, %v2509
    %v2515 = vlaneseq
    %v2516 = vshrl.u32 %v2515, 7
    %v2517 = vsub.s32 %v2264, %v2516
    %v2518 = vrot.slane %v1933, %v2517
    %v2519 = vsel %vm2269, %v2518, %v2514
    %v2520 = vlaneseq
    %v2521 = vshrl.u32 %v2520, 7
    %v2522 = vsub.s32 %v2271, %v2521
    %v2523 = vrot.slane %v1935, %v2522
    %v2524 = vsel %vm2276, %v2523, %v2519
    %v2525 = vlaneseq
    %v2526 = vshrl.u32 %v2525, 7
    %v2527 = vsub.s32 %v2278, %v2526
    %v2528 = vrot.slane %v1937, %v2527
    %v2529 = vsel %vm2283, %v2528, %v2524
    %v2530 = vlaneseq
    %v2531 = vshrl.u32 %v2530, 7
    %v2532 = vsub.s32 %v2285, %v2531
    %v2533 = vrot.slane %v1939, %v2532
    %v2534 = vsel %vm2290, %v2533, %v2529
    %v2535 = vlaneseq
    %v2536 = vshrl.u32 %v2535, 7
    %v2537 = vsub.s32 %v2292, %v2536
    %v2538 = vrot.slane %v1941, %v2537
    %v2539 = vsel %vm2297, %v2538, %v2534
    %v2540 = vlaneseq
    %v2541 = vshrl.u32 %v2540, 7
    %v2542 = vsub.s32 %v2299, %v2541
    %v2543 = vrot.slane %v1943, %v2542
    %v2544 = vsel %vm2304, %v2543, %v2539
    %v2545 = vlaneseq
    %v2546 = vshrl.u32 %v2545, 7
    %v2547 = vsub.s32 %v2306, %v2546
    %v2548 = vrot.slane %v1945, %v2547
    %v2549 = vsel %vm2311, %v2548, %v2544
    %v2550 = vlaneseq
    %v2551 = vshrl.u32 %v2550, 7
    %v2552 = vsub.s32 %v2203, %v2551
    %v2553 = vrot.slane %v1947, %v2552
    %v2554 = vlaneseq
    %v2555 = vshrl.u32 %v2554, 7
    %v2556 = vsub.s32 %v2208, %v2555
    %v2557 = vrot.slane %v1949, %v2556
    %v2558 = vsel %vm2213, %v2557, %v2553
    %v2559 = vlaneseq
    %v2560 = vshrl.u32 %v2559, 7
    %v2561 = vsub.s32 %v2215, %v2560
    %v2562 = vrot.slane %v1951, %v2561
    %v2563 = vsel %vm2220, %v2562, %v2558
    %v2564 = vlaneseq
    %v2565 = vshrl.u32 %v2564, 7
    %v2566 = vsub.s32 %v2222, %v2565
    %v2567 = vrot.slane %v1953, %v2566
    %v2568 = vsel %vm2227, %v2567, %v2563
    %v2569 = vlaneseq
    %v2570 = vshrl.u32 %v2569, 7
    %v2571 = vsub.s32 %v2229, %v2570
    %v2572 = vrot.slane %v1955, %v2571
    %v2573 = vsel %vm2234, %v2572, %v2568
    %v2574 = vlaneseq
    %v2575 = vshrl.u32 %v2574, 7
    %v2576 = vsub.s32 %v2236, %v2575
    %v2577 = vrot.slane %v1957, %v2576
    %v2578 = vsel %vm2241, %v2577, %v2573
    %v2579 = vlaneseq
    %v2580 = vshrl.u32 %v2579, 7
    %v2581 = vsub.s32 %v2243, %v2580
    %v2582 = vrot.slane %v1959, %v2581
    %v2583 = vsel %vm2248, %v2582, %v2578
    %v2584 = vlaneseq
    %v2585 = vshrl.u32 %v2584, 7
    %v2586 = vsub.s32 %v2250, %v2585
    %v2587 = vrot.slane %v1961, %v2586
    %v2588 = vsel %vm2255, %v2587, %v2583
    %v2589 = vlaneseq
    %v2590 = vshrl.u32 %v2589, 7
    %v2591 = vsub.s32 %v2257, %v2590
    %v2592 = vrot.slane %v1963, %v2591
    %v2593 = vsel %vm2262, %v2592, %v2588
    %v2594 = vlaneseq
    %v2595 = vshrl.u32 %v2594, 7
    %v2596 = vsub.s32 %v2264, %v2595
    %v2597 = vrot.slane %v1965, %v2596
    %v2598 = vsel %vm2269, %v2597, %v2593
    %v2599 = vlaneseq
    %v2600 = vshrl.u32 %v2599, 7
    %v2601 = vsub.s32 %v2271, %v2600
    %v2602 = vrot.slane %v1967, %v2601
    %v2603 = vsel %vm2276, %v2602, %v2598
    %v2604 = vlaneseq
    %v2605 = vshrl.u32 %v2604, 7
    %v2606 = vsub.s32 %v2278, %v2605
    %v2607 = vrot.slane %v1969, %v2606
    %v2608 = vsel %vm2283, %v2607, %v2603
    %v2609 = vlaneseq
    %v2610 = vshrl.u32 %v2609, 7
    %v2611 = vsub.s32 %v2285, %v2610
    %v2612 = vrot.slane %v1971, %v2611
    %v2613 = vsel %vm2290, %v2612, %v2608
    %v2614 = vlaneseq
    %v2615 = vshrl.u32 %v2614, 7
    %v2616 = vsub.s32 %v2292, %v2615
    %v2617 = vrot.slane %v1973, %v2616
    %v2618 = vsel %vm2297, %v2617, %v2613
    %v2619 = vlaneseq
    %v2620 = vshrl.u32 %v2619, 7
    %v2621 = vsub.s32 %v2299, %v2620
    %v2622 = vrot.slane %v1975, %v2621
    %v2623 = vsel %vm2304, %v2622, %v2618
    %v2624 = vlaneseq
    %v2625 = vshrl.u32 %v2624, 7
    %v2626 = vsub.s32 %v2306, %v2625
    %v2627 = vrot.slane %v1977, %v2626
    %v2628 = vsel %vm2311, %v2627, %v2623
    %v2629 = vlaneseq
    %v2630 = vshrl.u32 %v2629, 7
    %v2631 = vsub.s32 %v2203, %v2630
    %v2632 = vrot.slane %v1979, %v2631
    %v2633 = vlaneseq
    %v2634 = vshrl.u32 %v2633, 7
    %v2635 = vsub.s32 %v2208, %v2634
    %v2636 = vrot.slane %v1981, %v2635
    %v2637 = vsel %vm2213, %v2636, %v2632
    %v2638 = vlaneseq
    %v2639 = vshrl.u32 %v2638, 7
    %v2640 = vsub.s32 %v2215, %v2639
    %v2641 = vrot.slane %v1983, %v2640
    %v2642 = vsel %vm2220, %v2641, %v2637
    %v2643 = vlaneseq
    %v2644 = vshrl.u32 %v2643, 7
    %v2645 = vsub.s32 %v2222, %v2644
    %v2646 = vrot.slane %v1985, %v2645
    %v2647 = vsel %vm2227, %v2646, %v2642
    %v2648 = vlaneseq
    %v2649 = vshrl.u32 %v2648, 7
    %v2650 = vsub.s32 %v2229, %v2649
    %v2651 = vrot.slane %v1987, %v2650
    %v2652 = vsel %vm2234, %v2651, %v2647
    %v2653 = vlaneseq
    %v2654 = vshrl.u32 %v2653, 7
    %v2655 = vsub.s32 %v2236, %v2654
    %v2656 = vrot.slane %v1989, %v2655
    %v2657 = vsel %vm2241, %v2656, %v2652
    %v2658 = vlaneseq
    %v2659 = vshrl.u32 %v2658, 7
    %v2660 = vsub.s32 %v2243, %v2659
    %v2661 = vrot.slane %v1991, %v2660
    %v2662 = vsel %vm2248, %v2661, %v2657
    %v2663 = vlaneseq
    %v2664 = vshrl.u32 %v2663, 7
    %v2665 = vsub.s32 %v2250, %v2664
    %v2666 = vrot.slane %v1993, %v2665
    %v2667 = vsel %vm2255, %v2666, %v2662
    %v2668 = vlaneseq
    %v2669 = vshrl.u32 %v2668, 7
    %v2670 = vsub.s32 %v2257, %v2669
    %v2671 = vrot.slane %v1995, %v2670
    %v2672 = vsel %vm2262, %v2671, %v2667
    %v2673 = vlaneseq
    %v2674 = vshrl.u32 %v2673, 7
    %v2675 = vsub.s32 %v2264, %v2674
    %v2676 = vrot.slane %v1997, %v2675
    %v2677 = vsel %vm2269, %v2676, %v2672
    %v2678 = vlaneseq
    %v2679 = vshrl.u32 %v2678, 7
    %v2680 = vsub.s32 %v2271, %v2679
    %v2681 = vrot.slane %v1999, %v2680
    %v2682 = vsel %vm2276, %v2681, %v2677
    %v2683 = vlaneseq
    %v2684 = vshrl.u32 %v2683, 7
    %v2685 = vsub.s32 %v2278, %v2684
    %v2686 = vrot.slane %v2001, %v2685
    %v2687 = vsel %vm2283, %v2686, %v2682
    %v2688 = vlaneseq
    %v2689 = vshrl.u32 %v2688, 7
    %v2690 = vsub.s32 %v2285, %v2689
    %v2691 = vrot.slane %v2003, %v2690
    %v2692 = vsel %vm2290, %v2691, %v2687
    %v2693 = vlaneseq
    %v2694 = vshrl.u32 %v2693, 7
    %v2695 = vsub.s32 %v2292, %v2694
    %v2696 = vrot.slane %v2005, %v2695
    %v2697 = vsel %vm2297, %v2696, %v2692
    %v2698 = vlaneseq
    %v2699 = vshrl.u32 %v2698, 7
    %v2700 = vsub.s32 %v2299, %v2699
    %v2701 = vrot.slane %v2007, %v2700
    %v2702 = vsel %vm2304, %v2701, %v2697
    %v2703 = vlaneseq
    %v2704 = vshrl.u32 %v2703, 7
    %v2705 = vsub.s32 %v2306, %v2704
    %v2706 = vrot.slane %v2009, %v2705
    %v2707 = vsel %vm2311, %v2706, %v2702
    %v2708 = vlaneseq
    %v2709 = vshrl.u32 %v2708, 7
    %v2710 = vsub.s32 %v2203, %v2709
    %v2711 = vrot.slane %v2011, %v2710
    %v2712 = vlaneseq
    %v2713 = vshrl.u32 %v2712, 7
    %v2714 = vsub.s32 %v2208, %v2713
    %v2715 = vrot.slane %v2013, %v2714
    %v2716 = vsel %vm2213, %v2715, %v2711
    %v2717 = vlaneseq
    %v2718 = vshrl.u32 %v2717, 7
    %v2719 = vsub.s32 %v2215, %v2718
    %v2720 = vrot.slane %v2015, %v2719
    %v2721 = vsel %vm2220, %v2720, %v2716
    %v2722 = vlaneseq
    %v2723 = vshrl.u32 %v2722, 7
    %v2724 = vsub.s32 %v2222, %v2723
    %v2725 = vrot.slane %v2017, %v2724
    %v2726 = vsel %vm2227, %v2725, %v2721
    %v2727 = vlaneseq
    %v2728 = vshrl.u32 %v2727, 7
    %v2729 = vsub.s32 %v2229, %v2728
    %v2730 = vrot.slane %v2019, %v2729
    %v2731 = vsel %vm2234, %v2730, %v2726
    %v2732 = vlaneseq
    %v2733 = vshrl.u32 %v2732, 7
    %v2734 = vsub.s32 %v2236, %v2733
    %v2735 = vrot.slane %v2021, %v2734
    %v2736 = vsel %vm2241, %v2735, %v2731
    %v2737 = vlaneseq
    %v2738 = vshrl.u32 %v2737, 7
    %v2739 = vsub.s32 %v2243, %v2738
    %v2740 = vrot.slane %v2023, %v2739
    %v2741 = vsel %vm2248, %v2740, %v2736
    %v2742 = vlaneseq
    %v2743 = vshrl.u32 %v2742, 7
    %v2744 = vsub.s32 %v2250, %v2743
    %v2745 = vrot.slane %v2025, %v2744
    %v2746 = vsel %vm2255, %v2745, %v2741
    %v2747 = vlaneseq
    %v2748 = vshrl.u32 %v2747, 7
    %v2749 = vsub.s32 %v2257, %v2748
    %v2750 = vrot.slane %v2027, %v2749
    %v2751 = vsel %vm2262, %v2750, %v2746
    %v2752 = vlaneseq
    %v2753 = vshrl.u32 %v2752, 7
    %v2754 = vsub.s32 %v2264, %v2753
    %v2755 = vrot.slane %v2029, %v2754
    %v2756 = vsel %vm2269, %v2755, %v2751
    %v2757 = vlaneseq
    %v2758 = vshrl.u32 %v2757, 7
    %v2759 = vsub.s32 %v2271, %v2758
    %v2760 = vrot.slane %v2031, %v2759
    %v2761 = vsel %vm2276, %v2760, %v2756
    %v2762 = vlaneseq
    %v2763 = vshrl.u32 %v2762, 7
    %v2764 = vsub.s32 %v2278, %v2763
    %v2765 = vrot.slane %v2033, %v2764
    %v2766 = vsel %vm2283, %v2765, %v2761
    %v2767 = vlaneseq
    %v2768 = vshrl.u32 %v2767, 7
    %v2769 = vsub.s32 %v2285, %v2768
    %v2770 = vrot.slane %v2035, %v2769
    %v2771 = vsel %vm2290, %v2770, %v2766
    %v2772 = vlaneseq
    %v2773 = vshrl.u32 %v2772, 7
    %v2774 = vsub.s32 %v2292, %v2773
    %v2775 = vrot.slane %v2037, %v2774
    %v2776 = vsel %vm2297, %v2775, %v2771
    %v2777 = vlaneseq
    %v2778 = vshrl.u32 %v2777, 7
    %v2779 = vsub.s32 %v2299, %v2778
    %v2780 = vrot.slane %v2039, %v2779
    %v2781 = vsel %vm2304, %v2780, %v2776
    %v2782 = vlaneseq
    %v2783 = vshrl.u32 %v2782, 7
    %v2784 = vsub.s32 %v2306, %v2783
    %v2785 = vrot.slane %v2041, %v2784
    %v2786 = vsel %vm2311, %v2785, %v2781
    %v2787 = vlaneseq
    %v2788 = vshrl.u32 %v2787, 7
    %v2789 = vsub.s32 %v2203, %v2788
    %v2790 = vrot.slane %v2043, %v2789
    %v2791 = vlaneseq
    %v2792 = vshrl.u32 %v2791, 7
    %v2793 = vsub.s32 %v2208, %v2792
    %v2794 = vrot.slane %v2045, %v2793
    %v2795 = vsel %vm2213, %v2794, %v2790
    %v2796 = vlaneseq
    %v2797 = vshrl.u32 %v2796, 7
    %v2798 = vsub.s32 %v2215, %v2797
    %v2799 = vrot.slane %v2047, %v2798
    %v2800 = vsel %vm2220, %v2799, %v2795
    %v2801 = vlaneseq
    %v2802 = vshrl.u32 %v2801, 7
    %v2803 = vsub.s32 %v2222, %v2802
    %v2804 = vrot.slane %v2049, %v2803
    %v2805 = vsel %vm2227, %v2804, %v2800
    %v2806 = vlaneseq
    %v2807 = vshrl.u32 %v2806, 7
    %v2808 = vsub.s32 %v2229, %v2807
    %v2809 = vrot.slane %v2051, %v2808
    %v2810 = vsel %vm2234, %v2809, %v2805
    %v2811 = vlaneseq
    %v2812 = vshrl.u32 %v2811, 7
    %v2813 = vsub.s32 %v2236, %v2812
    %v2814 = vrot.slane %v2053, %v2813
    %v2815 = vsel %vm2241, %v2814, %v2810
    %v2816 = vlaneseq
    %v2817 = vshrl.u32 %v2816, 7
    %v2818 = vsub.s32 %v2243, %v2817
    %v2819 = vrot.slane %v2055, %v2818
    %v2820 = vsel %vm2248, %v2819, %v2815
    %v2821 = vlaneseq
    %v2822 = vshrl.u32 %v2821, 7
    %v2823 = vsub.s32 %v2250, %v2822
    %v2824 = vrot.slane %v2057, %v2823
    %v2825 = vsel %vm2255, %v2824, %v2820
    %v2826 = vlaneseq
    %v2827 = vshrl.u32 %v2826, 7
    %v2828 = vsub.s32 %v2257, %v2827
    %v2829 = vrot.slane %v2059, %v2828
    %v2830 = vsel %vm2262, %v2829, %v2825
    %v2831 = vlaneseq
    %v2832 = vshrl.u32 %v2831, 7
    %v2833 = vsub.s32 %v2264, %v2832
    %v2834 = vrot.slane %v2061, %v2833
    %v2835 = vsel %vm2269, %v2834, %v2830
    %v2836 = vlaneseq
    %v2837 = vshrl.u32 %v2836, 7
    %v2838 = vsub.s32 %v2271, %v2837
    %v2839 = vrot.slane %v2063, %v2838
    %v2840 = vsel %vm2276, %v2839, %v2835
    %v2841 = vlaneseq
    %v2842 = vshrl.u32 %v2841, 7
    %v2843 = vsub.s32 %v2278, %v2842
    %v2844 = vrot.slane %v2065, %v2843
    %v2845 = vsel %vm2283, %v2844, %v2840
    %v2846 = vlaneseq
    %v2847 = vshrl.u32 %v2846, 7
    %v2848 = vsub.s32 %v2285, %v2847
    %v2849 = vrot.slane %v2067, %v2848
    %v2850 = vsel %vm2290, %v2849, %v2845
    %v2851 = vlaneseq
    %v2852 = vshrl.u32 %v2851, 7
    %v2853 = vsub.s32 %v2292, %v2852
    %v2854 = vrot.slane %v2069, %v2853
    %v2855 = vsel %vm2297, %v2854, %v2850
    %v2856 = vlaneseq
    %v2857 = vshrl.u32 %v2856, 7
    %v2858 = vsub.s32 %v2299, %v2857
    %v2859 = vrot.slane %v2071, %v2858
    %v2860 = vsel %vm2304, %v2859, %v2855
    %v2861 = vlaneseq
    %v2862 = vshrl.u32 %v2861, 7
    %v2863 = vsub.s32 %v2306, %v2862
    %v2864 = vrot.slane %v2073, %v2863
    %v2865 = vsel %vm2311, %v2864, %v2860
    %vm2866 = vcmask 1041409
    %v2867 = vsel %vm2866, %v2391, %v2312
    %vm2868 = vcmask 1042434
    %v2869 = vsel %vm2868, %v2470, %v2867
    %vm2870 = vcmask 1043459
    %v2871 = vsel %vm2870, %v2549, %v2869
    %vm2872 = vcmask 1044484
    %v2873 = vsel %vm2872, %v2628, %v2871
    %vm2874 = vcmask 1045509
    %v2875 = vsel %vm2874, %v2707, %v2873
    %vm2876 = vcmask 1046534
    %v2877 = vsel %vm2876, %v2786, %v2875
    %vm2878 = vcmask 1047559
    %v2879 = vsel %vm2878, %v2865, %v2877
    %2881 = vst [vmem:[#allocation2] sm:$0xff] %v2879
    %v2882 = vld [vmem:[#allocation2] sm:$0xff]
    %v2883 = vld [vmem:[%s2] sm:$0xff]
    %vm2884 = vcmp.eq.f32.partialorder %v2883, 0.0
    %v2885 = vsel %vm2884, -1e+10, %v2882
    %v2886 = vld [vmem:[%s3] sm:$0x1]
    %v2888 = vlaneseq
    %v2889 = vshrl.u32 %v2888, 7
    %v2890 = vsub.s32 0, %v2889
    %v2891 = vrot.slane %v2886, %v2890
    %v2893 = vadd.f32 %v2885, %v2891
    %2894 = vmax.xlane.f32.xlu0 %v2893
    %v2895 = vpop.xlane.xlu0 %2894
    %v2896 = vsub.f32 %v2893, %v2895
    %v2897 = vmul.f32 %v2896, 1.442695
    %v2898 = vpow.pop %v2897
    %2899 = vadd.xlane.f32.xlu0 %v2898
    %v2900 = vpop.xlane.xlu0 %2899
    %v2901 = vrcp.pop %v2900
    %v2902 = vmul.f32 %v2898, %v2901
    %2903 = vst [vmem:[#allocation3] sm:$0xff] %v2902
    // Predicated region
    $region34: #{tpu_custom_call.1} parent=1 // pred_check
      _
    $region35: #{tpu_custom_call.1} parent=1 // pred_check_branch
      %2905 = sbr.rel (0) target = $region37
    $region36: #{tpu_custom_call.1} parent=1 // pred_region
      %s2907 = ssub.s32 128, 128
      %2908 = vsyncadd [#allocation4], %s2907
      %s2910 = sshll.u32 [#allocation3], 4
      %s2911 = int_to_ptr.vmem [resolvable:$true] %s2910
      %2913 = dma.vmem_to_hbm [thread:$0]  %s2911, 128, %s8, [#allocation4]
    $region37: #{tpu_custom_call.1} parent=1 // pred_fallthru
      _
    // Predicated region
    $region38: #{tpu_custom_call.1} parent=1 // pred_check
      _
    $region39: #{tpu_custom_call.1} parent=1 // pred_check_branch
      %2915 = sbr.rel (0) target = $region41
    $region40: #{tpu_custom_call.1} parent=1 // pred_region
      %2916 = dma.done [#allocation4], 128
    $region41: #{tpu_custom_call.1} parent=1 // pred_fallthru
      _
    %2917 = vsyncpa [#allocation4], 1

</llo_original>
